<compile_context>
chip_gen: v7x
topology: tpu7x:2x2x1
jax: 0.10.0
libtpu: 0.0.40
codegen_flags: <defaults>
</compile_context>

<pallas_src>
import jax
import jax.numpy as jnp
from jax.experimental import pallas as pl
from jax.experimental.pallas import tpu as pltpu

_LANE = 128            # vreg lane width: batch tile must be a multiple of this.
_MAX_TILE_B = 32768    # keeps per-step VMEM footprint < ~16 MiB (see accounting above).


def _round_up(x: int, m: int) -> int:
    return ((x + m - 1) // m) * m


def _mlp_kernel(x_ref, w1_ref, b1_ref, w2_ref, b2_ref, w3_ref, b3_ref, o_ref):
    """Fused MLP on one batch tile, feature-major (features on sublanes, batch on lanes).

    out = W3 @ relu(W2 @ relu(W1 @ x + b1) + b2) + b3
    """
    hp = jax.lax.Precision.HIGHEST
    x = x_ref[...]                                            # [n_input, tile_b]

    # Layer 1: Linear + ReLU (f32 accumulation on the MXU).
    h1 = jnp.dot(w1_ref[...], x, preferred_element_type=jnp.float32, precision=hp)
    h1 = jnp.maximum(h1 + b1_ref[...], 0.0)                   # [n_h1, tile_b]

    # Layer 2: Linear + ReLU.  Cast activations to the weight dtype so the
    # MXU takes its native bf16 path when weights are stored in bf16
    # (no-op for f32).  Accumulation stays f32.
    h2 = jnp.dot(w2_ref[...], h1.astype(w2_ref.dtype),
                 preferred_element_type=jnp.float32, precision=hp)
    h2 = jnp.maximum(h2 + b2_ref[...], 0.0)                   # [n_h2, tile_b]

    # Layer 3 (regression head): Linear, no activation.
    out = jnp.dot(w3_ref[...], h2.astype(w3_ref.dtype),
                  preferred_element_type=jnp.float32, precision=hp)
    o_ref[...] = (out + b3_ref[...]).astype(o_ref.dtype)      # [n_out, tile_b]


def mlp_regression_forward(x, params, *, tile_b: int = 8192, compute_dtype=None):
    """Run the fused MLP kernel.

    Args:
      x: [batch, n_input] activations (f32, or bf16 if you pass bf16 params).
      params: (w1, b1, w2, b2, w3, b3) with w in PyTorch layout [n_out, n_in]
        and b as [n_out, 1].
      tile_b: target batch-tile size (rounded to a multiple of 128, clamped to
        [128, 32768] and to the padded batch).  The kernel is grid-step-
        overhead bound, so bigger is better until the VMEM clamp.
      compute_dtype: optionally cast x and the weight matrices (not biases)
        to e.g. jnp.bfloat16 before the kernel to halve HBM traffic
        (recommended on v5e); accumulation stays f32.
    """
    w1, b1, w2, b2, w3, b3 = params
    batch, n_input = x.shape
    n_h1, n_h2, n_out = w1.shape[0], w2.shape[0], w3.shape[0]

    if compute_dtype is not None:
        x = x.astype(compute_dtype)
        w1, w2, w3 = (w.astype(compute_dtype) for w in (w1, w2, w3))

    # --- Lane-dense layout: transpose once in the wrapper (outside pallas_call).
    xt = x.T                                                   # [n_input, batch]

    # --- Batch tiling along the lane axis: tile must be a multiple of 128 and
    # divide the padded batch.  Zero-padded columns are sliced off afterwards.
    padded_min = _round_up(batch, _LANE)
    tile = max(_LANE, min(_round_up(tile_b, _LANE), _MAX_TILE_B, padded_min))
    # v7x has 2 TensorCores: make sure medium/large batches get >= 2 grid
    # steps so the "parallel" axis actually shards across both cores.
    if padded_min // tile <= 1 and padded_min >= 2 * _LANE:
        tile = _round_up(-(-padded_min // 2), _LANE)
    padded = _round_up(batch, tile)
    if padded != batch:
        xt = jnp.pad(xt, ((0, 0), (0, padded - batch)))
    grid = (padded // tile,)

    # x / out tiles walk the batch (lane) axis; weights & biases always map to
    # block (0, 0) so Pallas keeps them VMEM-resident (no per-step re-DMA).
    x_spec = pl.BlockSpec((n_input, tile), lambda i: (0, i))
    out_spec = pl.BlockSpec((n_out, tile), lambda i: (0, i))
    resident = lambda shape: pl.BlockSpec(shape, lambda i: (0, 0))
    in_specs = [
        x_spec,
        resident((n_h1, n_input)), resident((n_h1, 1)),
        resident((n_h2, n_h1)), resident((n_h2, 1)),
        resident((n_out, n_h2)), resident((n_out, 1)),
    ]

    x_bytes = jnp.dtype(xt.dtype).itemsize
    weight_bytes = sum(int(a.size) * jnp.dtype(a.dtype).itemsize
                       for a in (w1, b1, w2, b2, w3, b3))
    cost = pl.CostEstimate(
        flops=2 * padded * (n_input * n_h1 + n_h1 * n_h2 + n_h2 * n_out),
        transcendentals=0,
        bytes_accessed=padded * n_input * x_bytes + padded * n_out * 4 + weight_bytes,
    )

    out_t = pl.pallas_call(
        _mlp_kernel,
        out_shape=jax.ShapeDtypeStruct((n_out, padded), jnp.float32),
        grid=grid,
        in_specs=in_specs,
        out_specs=out_spec,
        compiler_params=pltpu.CompilerParams(
            # Batch tiles are independent -> megacore sharding on v7x.
            dimension_semantics=("parallel",),
            # Lane-dense footprint at tile_b=32768 is ~16 MiB, so 32 MiB is
            # safe on every generation (v7x: 64 MiB physical / 32 MiB scoped).
            vmem_limit_bytes=32 * 1024 * 1024,
        ),
        cost_estimate=cost,
    )(xt, w1, b1, w2, b2, w3, b3)

    # Slice off batch padding and return to the module's [batch, n_out] layout.
    return out_t[:, :batch].T


# ----------------------------------------------------------------------------
# Parameter init (matches MLP_Regression) and a pure-JAX reference.
# ----------------------------------------------------------------------------
def _xavier_uniform(key, n_in, n_out, dtype=jnp.float32):
    """torch.nn.init.xavier_uniform_ (gain=1) for an nn.Linear [n_out, n_in] weight."""
    limit = (6.0 / (n_in + n_out)) ** 0.5
    return jax.random.uniform(key, (n_out, n_in), dtype, minval=-limit, maxval=limit)


def init_params(key, n_input, n_hidden, n_output):
    n_units = [n_input, *n_hidden, n_output]
    params = []
    for l in range(len(n_units) - 1):
        key, wk, bk = jax.random.split(key, 3)
        n_in, n_out = n_units[l], n_units[l + 1]
        w = _xavier_uniform(wk, n_in, n_out)
        # nn.Linear default bias init: U(-1/sqrt(n_in), 1/sqrt(n_in)).
        bound = 1.0 / (n_in ** 0.5)
        b = jax.random.uniform(bk, (n_out, 1), jnp.float32, minval=-bound, maxval=bound)
        params.extend([w, b])
    return tuple(params)


def reference_forward(x, params):
    """Pure-JAX reference (f32, highest precision) for correctness checking."""
    w1, b1, w2, b2, w3, b3 = params
    hp = jax.lax.Precision.HIGHEST
    h1 = jnp.maximum(jnp.dot(x, w1.T, precision=hp) + b1.T, 0.0)
    h2 = jnp.maximum(jnp.dot(h1, w2.T, precision=hp) + b2.T, 0.0)
    return jnp.dot(h2, w3.T, precision=hp) + b3.T


if __name__ == "__main__":
    # Small shapes consistent with the module: batch=8, n_input=16,
    # n_hidden=[32, 32], n_output=8.
    batch, n_input, n_hidden, n_output = 8, 16, [32, 32], 8

    key = jax.random.PRNGKey(0)
    key, xk = jax.random.split(key)
    x = jax.random.normal(xk, (batch, n_input), jnp.float32)
    params = init_params(key, n_input, n_hidden, n_output)

    out = jax.block_until_ready(mlp_regression_forward(x, params))
    ref = reference_forward(x, params)
    assert out.shape == (batch, n_output)
    # Tolerance allows for MXU f32-emulation / accumulation-order differences.
    assert jnp.allclose(out, ref, atol=1e-4, rtol=1e-4), \
        float(jnp.max(jnp.abs(out - ref)))

    # Also exercise the multi-step grid + batch-padding path (batch not a
    # multiple of the tile; >=2 grid steps also covers the megacore split).
    key, xk2 = jax.random.split(key)
    x_big = jax.random.normal(xk2, (4100, n_input), jnp.float32)
    out_big = jax.block_until_ready(
        mlp_regression_forward(x_big, params, tile_b=1024)
    )
    ref_big = reference_forward(x_big, params)
    assert out_big.shape == (4100, n_output)
    assert jnp.allclose(out_big, ref_big, atol=1e-4, rtol=1e-4), \
        float(jnp.max(jnp.abs(out_big - ref_big)))

    print("KERNEL_OK")
</pallas_src>

<mosaic_0001>
module attributes {stable_mosaic.version = 11 : i64} {
  func.func @_mlp_kernel(%arg0: i32, %arg1: memref<16x128xf32, #tpu.memory_space<vmem>>, %arg2: memref<32x16xf32, #tpu.memory_space<vmem>>, %arg3: memref<32x1xf32, #tpu.memory_space<vmem>>, %arg4: memref<32x32xf32, #tpu.memory_space<vmem>>, %arg5: memref<32x1xf32, #tpu.memory_space<vmem>>, %arg6: memref<8x32xf32, #tpu.memory_space<vmem>>, %arg7: memref<8x1xf32, #tpu.memory_space<vmem>>, %arg8: memref<8x128xf32, #tpu.memory_space<vmem>>) attributes {dimension_semantics = [#tpu.dimension_semantics<parallel>], iteration_bounds = array<i64: 1>, scalar_prefetch = 0 : i64, scratch_operands = 0 : i64, tpu.core_type = #tpu.core_type<tc>, window_params = [{transform_indices = @transform_0, window_bounds = array<i64: 16, 128>}, {pipeline_mode = #tpu.pipeline_mode<synchronous>, transform_indices = @transform_1, window_bounds = array<i64: 32, 16>}, {pipeline_mode = #tpu.pipeline_mode<synchronous>, transform_indices = @transform_2, window_bounds = array<i64: 32, 1>}, {pipeline_mode = #tpu.pipeline_mode<synchronous>, transform_indices = @transform_3, window_bounds = array<i64: 32, 32>}, {pipeline_mode = #tpu.pipeline_mode<synchronous>, transform_indices = @transform_4, window_bounds = array<i64: 32, 1>}, {pipeline_mode = #tpu.pipeline_mode<synchronous>, transform_indices = @transform_5, window_bounds = array<i64: 8, 32>}, {pipeline_mode = #tpu.pipeline_mode<synchronous>, transform_indices = @transform_6, window_bounds = array<i64: 8, 1>}, {transform_indices = @transform_7, window_bounds = array<i64: 8, 128>}]} {
    %c0 = arith.constant 0 : index
    %c0_0 = arith.constant 0 : index
    %0 = vector.load %arg1[%c0, %c0_0] : memref<16x128xf32, #tpu.memory_space<vmem>>, vector<16x128xf32>
    %c0_1 = arith.constant 0 : index
    %c0_2 = arith.constant 0 : index
    %1 = vector.load %arg2[%c0_1, %c0_2] : memref<32x16xf32, #tpu.memory_space<vmem>>, vector<32x16xf32>
    %cst = arith.constant dense<0.000000e+00> : vector<32x128xf32>
    %2 = tpu.matmul %1, %0, %cst {dimension_numbers = #tpu.dot_dimension_numbers<[1], [0], [0], [1], [0, 0, 1, 1], [], []>, precision = #tpu.contract_precision<fp32>} : vector<32x16xf32>, vector<16x128xf32>, vector<32x128xf32> -> vector<32x128xf32>
    %c0_3 = arith.constant 0 : index
    %c0_4 = arith.constant 0 : index
    %3 = vector.load %arg3[%c0_3, %c0_4] : memref<32x1xf32, #tpu.memory_space<vmem>>, vector<32x1xf32>
    %4 = vector.broadcast %3 : vector<32x1xf32> to vector<32x128xf32>
    %5 = arith.addf %2, %4 : vector<32x128xf32>
    %cst_5 = arith.constant 0.000000e+00 : f32
    %6 = vector.broadcast %cst_5 : f32 to vector<32x128xf32>
    %7 = arith.maximumf %5, %6 : vector<32x128xf32>
    %c0_6 = arith.constant 0 : index
    %c0_7 = arith.constant 0 : index
    %8 = vector.load %arg4[%c0_6, %c0_7] : memref<32x32xf32, #tpu.memory_space<vmem>>, vector<32x32xf32>
    %cst_8 = arith.constant dense<0.000000e+00> : vector<32x128xf32>
    %9 = tpu.matmul %8, %7, %cst_8 {dimension_numbers = #tpu.dot_dimension_numbers<[1], [0], [0], [1], [0, 0, 1, 1], [], []>, precision = #tpu.contract_precision<fp32>} : vector<32x32xf32>, vector<32x128xf32>, vector<32x128xf32> -> vector<32x128xf32>
    %c0_9 = arith.constant 0 : index
    %c0_10 = arith.constant 0 : index
    %10 = vector.load %arg5[%c0_9, %c0_10] : memref<32x1xf32, #tpu.memory_space<vmem>>, vector<32x1xf32>
    %11 = vector.broadcast %10 : vector<32x1xf32> to vector<32x128xf32>
    %12 = arith.addf %9, %11 : vector<32x128xf32>
    %cst_11 = arith.constant 0.000000e+00 : f32
    %13 = vector.broadcast %cst_11 : f32 to vector<32x128xf32>
    %14 = arith.maximumf %12, %13 : vector<32x128xf32>
    %c0_12 = arith.constant 0 : index
    %c0_13 = arith.constant 0 : index
    %15 = vector.load %arg6[%c0_12, %c0_13] : memref<8x32xf32, #tpu.memory_space<vmem>>, vector<8x32xf32>
    %cst_14 = arith.constant dense<0.000000e+00> : vector<8x128xf32>
    %16 = tpu.matmul %15, %14, %cst_14 {dimension_numbers = #tpu.dot_dimension_numbers<[1], [0], [0], [1], [0, 0, 1, 1], [], []>, precision = #tpu.contract_precision<fp32>} : vector<8x32xf32>, vector<32x128xf32>, vector<8x128xf32> -> vector<8x128xf32>
    %c0_15 = arith.constant 0 : index
    %c0_16 = arith.constant 0 : index
    %17 = vector.load %arg7[%c0_15, %c0_16] : memref<8x1xf32, #tpu.memory_space<vmem>>, vector<8x1xf32>
    %18 = vector.broadcast %17 : vector<8x1xf32> to vector<8x128xf32>
    %19 = arith.addf %16, %18 : vector<8x128xf32>
    %c0_17 = arith.constant 0 : index
    %c0_18 = arith.constant 0 : index
    %20 = vector.load %arg8[%c0_17, %c0_18] : memref<8x128xf32, #tpu.memory_space<vmem>>, vector<8x128xf32>
    tpu.vector_store %arg8[%c0_17, %c0_18], %19 {strides = array<i32>} : memref<8x128xf32, #tpu.memory_space<vmem>>, vector<8x128xf32>,
    return
  }
  func.func @transform_0(%arg0: i32) -> (i32, i32) {
    %c0_i32 = arith.constant 0 : i32
    %c0_i32_0 = arith.constant 0 : i32
    return %c0_i32, %arg0 : i32, i32
  }
  func.func @transform_1(%arg0: i32) -> (i32, i32) {
    %c0_i32 = arith.constant 0 : i32
    %c0_i32_0 = arith.constant 0 : i32
    %c0_i32_1 = arith.constant 0 : i32
    return %c0_i32, %c0_i32_0 : i32, i32
  }
  func.func @transform_2(%arg0: i32) -> (i32, i32) {
    %c0_i32 = arith.constant 0 : i32
    %c0_i32_0 = arith.constant 0 : i32
    %c0_i32_1 = arith.constant 0 : i32
    return %c0_i32, %c0_i32_0 : i32, i32
  }
  func.func @transform_3(%arg0: i32) -> (i32, i32) {
    %c0_i32 = arith.constant 0 : i32
    %c0_i32_0 = arith.constant 0 : i32
    %c0_i32_1 = arith.constant 0 : i32
    return %c0_i32, %c0_i32_0 : i32, i32
  }
  func.func @transform_4(%arg0: i32) -> (i32, i32) {
    %c0_i32 = arith.constant 0 : i32
    %c0_i32_0 = arith.constant 0 : i32
    %c0_i32_1 = arith.constant 0 : i32
    return %c0_i32, %c0_i32_0 : i32, i32
  }
  func.func @transform_5(%arg0: i32) -> (i32, i32) {
    %c0_i32 = arith.constant 0 : i32
    %c0_i32_0 = arith.constant 0 : i32
    %c0_i32_1 = arith.constant 0 : i32
    return %c0_i32, %c0_i32_0 : i32, i32
  }
  func.func @transform_6(%arg0: i32) -> (i32, i32) {
    %c0_i32 = arith.constant 0 : i32
    %c0_i32_0 = arith.constant 0 : i32
    %c0_i32_1 = arith.constant 0 : i32
    return %c0_i32, %c0_i32_0 : i32, i32
  }
  func.func @transform_7(%arg0: i32) -> (i32, i32) {
    %c0_i32 = arith.constant 0 : i32
    %c0_i32_0 = arith.constant 0 : i32
    return %c0_i32, %arg0 : i32, i32
  }
}

</mosaic_0001>

<llo_original>
// kernel: tpu_custom_call.1
$region0: #{tpu_custom_call.1}
  #allocation0 [shape = 'u32[]', space=smem, size = 0x4, offset = 0x4, fixed_abs, tag = 'smem constant byte address 0x4 - core index']
  #allocation1 [shape = 'u32[144,128]{1,0:T(1,128)}', space=vmem, size = 0x12000, scoped, tag = 'internal scratch']
  %s0 = inlined_call_operand.vmem [shape: f32[16,128], index: 0, kind: input, shape index: {}]
  %s1 = inlined_call_operand.vmem [shape: f32[32,16], index: 1, kind: input, shape index: {}]
  %s2 = inlined_call_operand.vmem [shape: f32[32,1], index: 2, kind: input, shape index: {}]
  %s3 = inlined_call_operand.vmem [shape: f32[32,32], index: 3, kind: input, shape index: {}]
  %s4 = inlined_call_operand.vmem [shape: f32[32,1], index: 4, kind: input, shape index: {}]
  %s5 = inlined_call_operand.vmem [shape: f32[8,32], index: 5, kind: input, shape index: {}]
  %s6 = inlined_call_operand.vmem [shape: f32[8,1], index: 6, kind: input, shape index: {}]
  %s7 = inlined_call_operand.hbm [shape: f32[8,128], index: 7, kind: output, shape index: {}]
  %s8 = sld [smem:[#allocation0]]
  $region38: #{tpu_custom_call.1} parent=0
    _
  %s10 = ssub.s32 1, %s8
  %s11 = scalar_select 0, %s10, %s8
  $region1: #{tpu_custom_call.1} parent=0
    #allocation2 [shape = 'u8[4096]{0}', space=vmem, size = 0x1000, scoped, tag = 'output window, operand 0, single buffered']
    #allocation3 [shape = 's32[1]{0}', space=sflag, size = 0x4, scoped, tag = 'scoped memory for tpu_custom_call.1']
    %12 = vsyncpa [#allocation3], 0
    // Predicated region
    $region2: #{tpu_custom_call.1} parent=1 // pred_check
      _
    $region3: #{tpu_custom_call.1} parent=1 // pred_check_branch
      %14 = sbr.rel (0) target = $region5
    $region4: #{tpu_custom_call.1} parent=1 // pred_region
      _
    $region5: #{tpu_custom_call.1} parent=1 // pred_fallthru
      _
    // Predicated region
    $region6: #{tpu_custom_call.1} parent=1 // pred_check
      _
    $region7: #{tpu_custom_call.1} parent=1 // pred_check_branch
      %16 = sbr.rel (0) target = $region9
    $region8: #{tpu_custom_call.1} parent=1 // pred_region
      _
    $region9: #{tpu_custom_call.1} parent=1 // pred_fallthru
      _
    // Predicated region
    $region10: #{tpu_custom_call.1} parent=1 // pred_check
      _
    $region11: #{tpu_custom_call.1} parent=1 // pred_check_branch
      %18 = sbr.rel (0) target = $region13
    $region12: #{tpu_custom_call.1} parent=1 // pred_region
      _
    $region13: #{tpu_custom_call.1} parent=1 // pred_fallthru
      _
    // Predicated region
    $region14: #{tpu_custom_call.1} parent=1 // pred_check
      _
    $region15: #{tpu_custom_call.1} parent=1 // pred_check_branch
      %20 = sbr.rel (0) target = $region17
    $region16: #{tpu_custom_call.1} parent=1 // pred_region
      _
    $region17: #{tpu_custom_call.1} parent=1 // pred_fallthru
      _
    // Predicated region
    $region18: #{tpu_custom_call.1} parent=1 // pred_check
      _
    $region19: #{tpu_custom_call.1} parent=1 // pred_check_branch
      %22 = sbr.rel (0) target = $region21
    $region20: #{tpu_custom_call.1} parent=1 // pred_region
      _
    $region21: #{tpu_custom_call.1} parent=1 // pred_fallthru
      _
    // Predicated region
    $region22: #{tpu_custom_call.1} parent=1 // pred_check
      _
    $region23: #{tpu_custom_call.1} parent=1 // pred_check_branch
      %24 = sbr.rel (0) target = $region25
    $region24: #{tpu_custom_call.1} parent=1 // pred_region
      _
    $region25: #{tpu_custom_call.1} parent=1 // pred_fallthru
      _
    // Predicated region
    $region26: #{tpu_custom_call.1} parent=1 // pred_check
      _
    $region27: #{tpu_custom_call.1} parent=1 // pred_check_branch
      %26 = sbr.rel (0) target = $region29
    $region28: #{tpu_custom_call.1} parent=1 // pred_region
      _
    $region29: #{tpu_custom_call.1} parent=1 // pred_fallthru
      _
    %v27 = vld [vmem:[%s0] sm:$0xff]
    %v28 = vld [vmem:[%s0 + $0x8] sm:$0xff]
    %v29 = vld [vmem:[%s1] sm:$0xff]
    %v30 = vld [vmem:[%s1 + $0x8] sm:$0xff]
    %v31 = vld [vmem:[%s1 + $0x10] sm:$0xff]
    %v32 = vld [vmem:[%s1 + $0x18] sm:$0xff]
    %v33 = vld [vmem:[%s2] sm:$0xff]
    %v34 = vld [vmem:[%s2 + $0x8] sm:$0xff]
    %v35 = vld [vmem:[%s2 + $0x10] sm:$0xff]
    %v36 = vld [vmem:[%s2 + $0x18] sm:$0xff]
    %38 = vset.pattern.permute.xlu0 0
    %39 = vperm.xlu0 %38, %v33
    %v40 = vpop.permute.xlu0 %39
    %43 = vset.pattern.permute.xlu0 0
    %44 = vperm.xlu0 %43, %v34
    %v45 = vpop.permute.xlu0 %44
    %48 = vset.pattern.permute.xlu0 0
    %49 = vperm.xlu0 %48, %v35
    %v50 = vpop.permute.xlu0 %49
    %53 = vset.pattern.permute.xlu0 0
    %54 = vperm.xlu0 %53, %v36
    %v55 = vpop.permute.xlu0 %54
    %vm57 = vcmask 130048
    %v59 = vsel %vm57, %v29, 0
    %v62 = vsel %vm57, %v30, 0
    %v65 = vsel %vm57, %v31, 0
    %v68 = vsel %vm57, %v32, 0
    %70 = vmatprep.subr.mxu0 0.0
    %v71 = vand.u32 %v27, 4294901760
    %72 = vmatpush1.msra.mxu0 %v71
    %73 = vmatprep.subr.mxu0 0.0
    %v74 = vand.u32 %v28, 4294901760
    %75 = vmatpush1.msra.mxu0 %v74
    %76 = vmatprep.subr.mxu0 0.0
    %77 = vmatpush1.msra.mxu0 0.0
    %78 = vmatprep.subr.mxu0 0.0
    %79 = vmatpush1.msra.mxu0 0.0
    %80 = vmatprep.subr.mxu0 0.0
    %81 = vmatpush1.msra.mxu0 0.0
    %82 = vmatprep.subr.mxu0 0.0
    %83 = vmatpush1.msra.mxu0 0.0
    %84 = vmatprep.subr.mxu0 0.0
    %85 = vmatpush1.msra.mxu0 0.0
    %86 = vmatprep.subr.mxu0 0.0
    %87 = vmatpush1.msra.mxu0 0.0
    %88 = vmatprep.subr.mxu0 0.0
    %89 = vmatpush1.msra.mxu0 0.0
    %90 = vmatprep.subr.mxu0 0.0
    %91 = vmatpush1.msra.mxu0 0.0
    %92 = vmatprep.subr.mxu0 0.0
    %93 = vmatpush1.msra.mxu0 0.0
    %94 = vmatprep.subr.mxu0 0.0
    %95 = vmatpush1.msra.mxu0 0.0
    %96 = vmatprep.subr.mxu0 0.0
    %97 = vmatpush1.msra.mxu0 0.0
    %98 = vmatprep.subr.mxu0 0.0
    %99 = vmatpush1.msra.mxu0 0.0
    %100 = vmatprep.subr.mxu0 0.0
    %101 = vmatpush1.msra.mxu0 0.0
    %102 = vmatprep.subr.mxu0 0.0
    %103 = vmatpush1.msra.mxu0 0.0
    %104 = vmatprep.subr.mxu0 0.0
    %105 = vmatpush1.msra.mxu0 0.0
    %106 = vmatprep.subr.mxu0 0.0
    %107 = vmatpush1.msra.mxu0 0.0
    %108 = vmatprep.subr.mxu0 0.0
    %109 = vmatpush1.msra.mxu0 0.0
    %110 = vmatprep.subr.mxu0 0.0
    %111 = vmatpush1.msra.mxu0 0.0
    %112 = vmatprep.subr.mxu0 0.0
    %113 = vmatpush1.msra.mxu0 0.0
    %114 = vmatprep.subr.mxu0 0.0
    %115 = vmatpush1.msra.mxu0 0.0
    %116 = vmatprep.subr.mxu0 0.0
    %117 = vmatpush1.msra.mxu0 0.0
    %118 = vmatprep.subr.mxu0 0.0
    %119 = vmatpush1.msra.mxu0 0.0
    %120 = vmatprep.subr.mxu0 0.0
    %121 = vmatpush1.msra.mxu0 0.0
    %122 = vmatprep.subr.mxu0 0.0
    %123 = vmatpush1.msra.mxu0 0.0
    %124 = vmatprep.subr.mxu0 0.0
    %125 = vmatpush1.msra.mxu0 0.0
    %126 = vmatprep.subr.mxu0 0.0
    %127 = vmatpush1.msra.mxu0 0.0
    %128 = vmatprep.subr.mxu0 0.0
    %129 = vmatpush1.msra.mxu0 0.0
    %130 = vmatprep.subr.mxu0 0.0
    %131 = vmatpush1.msra.mxu0 0.0
    %132 = vmatprep.subr.mxu0 0.0
    %133 = vmatpush1.msra.mxu0 0.0
    %134 = vmatprep.subr.mxu0 0.0
    %135 = vmatpush1.msra.mxu0 0.0
    %136 = vmatprep.mubr.f32.mxu0 0.0
    %v137 = vand.u32 %v59, 4294901760
    %v138 = vsub.f32 %v59, %v137
    %v139 = vand.u32 %v138, 4294901760
    %v140 = vsub.f32 %v138, %v139
    %v141 = vand.u32 %v140, 4294901760
    %142 = vmatmul.mubr.f32.gmra.mrb[0].mxu0 %v141
    %v143 = vpop.f32.mrb[0].mxu0
    %v144 = vadd.f32 %v40, %v143
    %v145 = vpop.f32.mrb[0].mxu0
    %146 = vmatprep.mubr.f32.mxu0 0.0
    %v147 = vand.u32 %v62, 4294901760
    %v148 = vsub.f32 %v62, %v147
    %v149 = vand.u32 %v148, 4294901760
    %v150 = vsub.f32 %v148, %v149
    %v151 = vand.u32 %v150, 4294901760
    %152 = vmatmul.mubr.f32.gmra.mrb[0].mxu0 %v151
    %v153 = vpop.f32.mrb[0].mxu0
    %v154 = vadd.f32 %v45, %v153
    %v155 = vpop.f32.mrb[0].mxu0
    %156 = vmatprep.mubr.f32.mxu0 0.0
    %v157 = vand.u32 %v65, 4294901760
    %v158 = vsub.f32 %v65, %v157
    %v159 = vand.u32 %v158, 4294901760
    %v160 = vsub.f32 %v158, %v159
    %v161 = vand.u32 %v160, 4294901760
    %162 = vmatmul.mubr.f32.gmra.mrb[0].mxu0 %v161
    %v163 = vpop.f32.mrb[0].mxu0
    %v164 = vadd.f32 %v50, %v163
    %v165 = vpop.f32.mrb[0].mxu0
    %166 = vmatprep.mubr.f32.mxu0 0.0
    %v167 = vand.u32 %v68, 4294901760
    %v168 = vsub.f32 %v68, %v167
    %v169 = vand.u32 %v168, 4294901760
    %v170 = vsub.f32 %v168, %v169
    %v171 = vand.u32 %v170, 4294901760
    %172 = vmatmul.mubr.f32.gmra.mrb[0].mxu0 %v171
    %v173 = vpop.f32.mrb[0].mxu0
    %v174 = vadd.f32 %v55, %v173
    %v175 = vpop.f32.mrb[0].mxu0
    %176 = vdwg.mxu0
    %177 = vmatprep.subr.mxu0 0.0
    %v178 = vand.u32 %v27, 4294901760
    %v179 = vsub.f32 %v27, %v178
    %v180 = vand.u32 %v179, 4294901760
    %v181 = vsub.f32 %v179, %v180
    %v182 = vand.u32 %v181, 4294901760
    %183 = vmatpush1.msra.mxu0 %v182
    %184 = vmatprep.subr.mxu0 0.0
    %v185 = vand.u32 %v28, 4294901760
    %v186 = vsub.f32 %v28, %v185
    %v187 = vand.u32 %v186, 4294901760
    %v188 = vsub.f32 %v186, %v187
    %v189 = vand.u32 %v188, 4294901760
    %190 = vmatpush1.msra.mxu0 %v189
    %191 = vmatprep.subr.mxu0 0.0
    %192 = vmatpush1.msra.mxu0 0.0
    %193 = vmatprep.subr.mxu0 0.0
    %194 = vmatpush1.msra.mxu0 0.0
    %195 = vmatprep.subr.mxu0 0.0
    %196 = vmatpush1.msra.mxu0 0.0
    %197 = vmatprep.subr.mxu0 0.0
    %198 = vmatpush1.msra.mxu0 0.0
    %199 = vmatprep.subr.mxu0 0.0
    %200 = vmatpush1.msra.mxu0 0.0
    %201 = vmatprep.subr.mxu0 0.0
    %202 = vmatpush1.msra.mxu0 0.0
    %203 = vmatprep.subr.mxu0 0.0
    %204 = vmatpush1.msra.mxu0 0.0
    %205 = vmatprep.subr.mxu0 0.0
    %206 = vmatpush1.msra.mxu0 0.0
    %207 = vmatprep.subr.mxu0 0.0
    %208 = vmatpush1.msra.mxu0 0.0
    %209 = vmatprep.subr.mxu0 0.0
    %210 = vmatpush1.msra.mxu0 0.0
    %211 = vmatprep.subr.mxu0 0.0
    %212 = vmatpush1.msra.mxu0 0.0
    %213 = vmatprep.subr.mxu0 0.0
    %214 = vmatpush1.msra.mxu0 0.0
    %215 = vmatprep.subr.mxu0 0.0
    %216 = vmatpush1.msra.mxu0 0.0
    %217 = vmatprep.subr.mxu0 0.0
    %218 = vmatpush1.msra.mxu0 0.0
    %219 = vmatprep.subr.mxu0 0.0
    %220 = vmatpush1.msra.mxu0 0.0
    %221 = vmatprep.subr.mxu0 0.0
    %222 = vmatpush1.msra.mxu0 0.0
    %223 = vmatprep.subr.mxu0 0.0
    %224 = vmatpush1.msra.mxu0 0.0
    %225 = vmatprep.subr.mxu0 0.0
    %226 = vmatpush1.msra.mxu0 0.0
    %227 = vmatprep.subr.mxu0 0.0
    %228 = vmatpush1.msra.mxu0 0.0
    %229 = vmatprep.subr.mxu0 0.0
    %230 = vmatpush1.msra.mxu0 0.0
    %231 = vmatprep.subr.mxu0 0.0
    %232 = vmatpush1.msra.mxu0 0.0
    %233 = vmatprep.subr.mxu0 0.0
    %234 = vmatpush1.msra.mxu0 0.0
    %235 = vmatprep.subr.mxu0 0.0
    %236 = vmatpush1.msra.mxu0 0.0
    %237 = vmatprep.subr.mxu0 0.0
    %238 = vmatpush1.msra.mxu0 0.0
    %239 = vmatprep.subr.mxu0 0.0
    %240 = vmatpush1.msra.mxu0 0.0
    %241 = vmatprep.subr.mxu0 0.0
    %242 = vmatpush1.msra.mxu0 0.0
    %243 = vmatprep.subr.mxu0 0.0
    %244 = vmatpush1.msra.mxu0 0.0
    %245 = vmatprep.subr.mxu0 0.0
    %246 = vmatpush1.msra.mxu0 0.0
    %247 = vmatprep.subr.mxu0 0.0
    %248 = vmatpush1.msra.mxu0 0.0
    %249 = vmatprep.subr.mxu0 0.0
    %250 = vmatpush1.msra.mxu0 0.0
    %251 = vmatprep.mubr.f32.mxu0 0.0
    %v252 = vand.u32 %v59, 4294901760
    %253 = vmatmul.mubr.f32.gmra.mrb[0].mxu0 %v252
    %v254 = vpop.f32.mrb[0].mxu0
    %v255 = vadd.f32 %v144, %v254
    %v256 = vpop.f32.mrb[0].mxu0
    %257 = vmatprep.mubr.f32.mxu0 0.0
    %v258 = vand.u32 %v62, 4294901760
    %259 = vmatmul.mubr.f32.gmra.mrb[0].mxu0 %v258
    %v260 = vpop.f32.mrb[0].mxu0
    %v261 = vadd.f32 %v154, %v260
    %v262 = vpop.f32.mrb[0].mxu0
    %263 = vmatprep.mubr.f32.mxu0 0.0
    %v264 = vand.u32 %v65, 4294901760
    %265 = vmatmul.mubr.f32.gmra.mrb[0].mxu0 %v264
    %v266 = vpop.f32.mrb[0].mxu0
    %v267 = vadd.f32 %v164, %v266
    %v268 = vpop.f32.mrb[0].mxu0
    %269 = vmatprep.mubr.f32.mxu0 0.0
    %v270 = vand.u32 %v68, 4294901760
    %271 = vmatmul.mubr.f32.gmra.mrb[0].mxu0 %v270
    %v272 = vpop.f32.mrb[0].mxu0
    %v273 = vadd.f32 %v174, %v272
    %v274 = vpop.f32.mrb[0].mxu0
    %275 = vdwg.mxu0
    %276 = vmatprep.subr.mxu0 0.0
    %v277 = vand.u32 %v27, 4294901760
    %v278 = vsub.f32 %v27, %v277
    %279 = vmatpush1.msra.mxu0 %v278
    %280 = vmatprep.subr.mxu0 0.0
    %v281 = vand.u32 %v28, 4294901760
    %v282 = vsub.f32 %v28, %v281
    %283 = vmatpush1.msra.mxu0 %v282
    %284 = vmatprep.subr.mxu0 0.0
    %285 = vmatpush1.msra.mxu0 0.0
    %286 = vmatprep.subr.mxu0 0.0
    %287 = vmatpush1.msra.mxu0 0.0
    %288 = vmatprep.subr.mxu0 0.0
    %289 = vmatpush1.msra.mxu0 0.0
    %290 = vmatprep.subr.mxu0 0.0
    %291 = vmatpush1.msra.mxu0 0.0
    %292 = vmatprep.subr.mxu0 0.0
    %293 = vmatpush1.msra.mxu0 0.0
    %294 = vmatprep.subr.mxu0 0.0
    %295 = vmatpush1.msra.mxu0 0.0
    %296 = vmatprep.subr.mxu0 0.0
    %297 = vmatpush1.msra.mxu0 0.0
    %298 = vmatprep.subr.mxu0 0.0
    %299 = vmatpush1.msra.mxu0 0.0
    %300 = vmatprep.subr.mxu0 0.0
    %301 = vmatpush1.msra.mxu0 0.0
    %302 = vmatprep.subr.mxu0 0.0
    %303 = vmatpush1.msra.mxu0 0.0
    %304 = vmatprep.subr.mxu0 0.0
    %305 = vmatpush1.msra.mxu0 0.0
    %306 = vmatprep.subr.mxu0 0.0
    %307 = vmatpush1.msra.mxu0 0.0
    %308 = vmatprep.subr.mxu0 0.0
    %309 = vmatpush1.msra.mxu0 0.0
    %310 = vmatprep.subr.mxu0 0.0
    %311 = vmatpush1.msra.mxu0 0.0
    %312 = vmatprep.subr.mxu0 0.0
    %313 = vmatpush1.msra.mxu0 0.0
    %314 = vmatprep.subr.mxu0 0.0
    %315 = vmatpush1.msra.mxu0 0.0
    %316 = vmatprep.subr.mxu0 0.0
    %317 = vmatpush1.msra.mxu0 0.0
    %318 = vmatprep.subr.mxu0 0.0
    %319 = vmatpush1.msra.mxu0 0.0
    %320 = vmatprep.subr.mxu0 0.0
    %321 = vmatpush1.msra.mxu0 0.0
    %322 = vmatprep.subr.mxu0 0.0
    %323 = vmatpush1.msra.mxu0 0.0
    %324 = vmatprep.subr.mxu0 0.0
    %325 = vmatpush1.msra.mxu0 0.0
    %326 = vmatprep.subr.mxu0 0.0
    %327 = vmatpush1.msra.mxu0 0.0
    %328 = vmatprep.subr.mxu0 0.0
    %329 = vmatpush1.msra.mxu0 0.0
    %330 = vmatprep.subr.mxu0 0.0
    %331 = vmatpush1.msra.mxu0 0.0
    %332 = vmatprep.subr.mxu0 0.0
    %333 = vmatpush1.msra.mxu0 0.0
    %334 = vmatprep.subr.mxu0 0.0
    %335 = vmatpush1.msra.mxu0 0.0
    %336 = vmatprep.subr.mxu0 0.0
    %337 = vmatpush1.msra.mxu0 0.0
    %338 = vmatprep.subr.mxu0 0.0
    %339 = vmatpush1.msra.mxu0 0.0
    %340 = vmatprep.subr.mxu0 0.0
    %341 = vmatpush1.msra.mxu0 0.0
    %342 = vmatprep.subr.mxu0 0.0
    %343 = vmatpush1.msra.mxu0 0.0
    %344 = vmatprep.mubr.f32.mxu0 0.0
    %v345 = vand.u32 %v59, 4294901760
    %v346 = vsub.f32 %v59, %v345
    %347 = vmatmul.mubr.f32.gmra.mrb[0].mxu0 %v346
    %v348 = vpop.f32.mrb[0].mxu0
    %v349 = vadd.f32 %v255, %v348
    %v350 = vpop.f32.mrb[0].mxu0
    %351 = vmatprep.mubr.f32.mxu0 0.0
    %v352 = vand.u32 %v62, 4294901760
    %v353 = vsub.f32 %v62, %v352
    %354 = vmatmul.mubr.f32.gmra.mrb[0].mxu0 %v353
    %v355 = vpop.f32.mrb[0].mxu0
    %v356 = vadd.f32 %v261, %v355
    %v357 = vpop.f32.mrb[0].mxu0
    %358 = vmatprep.mubr.f32.mxu0 0.0
    %v359 = vand.u32 %v65, 4294901760
    %v360 = vsub.f32 %v65, %v359
    %361 = vmatmul.mubr.f32.gmra.mrb[0].mxu0 %v360
    %v362 = vpop.f32.mrb[0].mxu0
    %v363 = vadd.f32 %v267, %v362
    %v364 = vpop.f32.mrb[0].mxu0
    %365 = vmatprep.mubr.f32.mxu0 0.0
    %v366 = vand.u32 %v68, 4294901760
    %v367 = vsub.f32 %v68, %v366
    %368 = vmatmul.mubr.f32.gmra.mrb[0].mxu0 %v367
    %v369 = vpop.f32.mrb[0].mxu0
    %v370 = vadd.f32 %v273, %v369
    %v371 = vpop.f32.mrb[0].mxu0
    %372 = vdwg.mxu0
    %373 = vmatprep.subr.mxu0 0.0
    %v374 = vand.u32 %v27, 4294901760
    %375 = vmatpush1.msra.mxu0 %v374
    %376 = vmatprep.subr.mxu0 0.0
    %v377 = vand.u32 %v28, 4294901760
    %378 = vmatpush1.msra.mxu0 %v377
    %379 = vmatprep.subr.mxu0 0.0
    %380 = vmatpush1.msra.mxu0 0.0
    %381 = vmatprep.subr.mxu0 0.0
    %382 = vmatpush1.msra.mxu0 0.0
    %383 = vmatprep.subr.mxu0 0.0
    %384 = vmatpush1.msra.mxu0 0.0
    %385 = vmatprep.subr.mxu0 0.0
    %386 = vmatpush1.msra.mxu0 0.0
    %387 = vmatprep.subr.mxu0 0.0
    %388 = vmatpush1.msra.mxu0 0.0
    %389 = vmatprep.subr.mxu0 0.0
    %390 = vmatpush1.msra.mxu0 0.0
    %391 = vmatprep.subr.mxu0 0.0
    %392 = vmatpush1.msra.mxu0 0.0
    %393 = vmatprep.subr.mxu0 0.0
    %394 = vmatpush1.msra.mxu0 0.0
    %395 = vmatprep.subr.mxu0 0.0
    %396 = vmatpush1.msra.mxu0 0.0
    %397 = vmatprep.subr.mxu0 0.0
    %398 = vmatpush1.msra.mxu0 0.0
    %399 = vmatprep.subr.mxu0 0.0
    %400 = vmatpush1.msra.mxu0 0.0
    %401 = vmatprep.subr.mxu0 0.0
    %402 = vmatpush1.msra.mxu0 0.0
    %403 = vmatprep.subr.mxu0 0.0
    %404 = vmatpush1.msra.mxu0 0.0
    %405 = vmatprep.subr.mxu0 0.0
    %406 = vmatpush1.msra.mxu0 0.0
    %407 = vmatprep.subr.mxu0 0.0
    %408 = vmatpush1.msra.mxu0 0.0
    %409 = vmatprep.subr.mxu0 0.0
    %410 = vmatpush1.msra.mxu0 0.0
    %411 = vmatprep.subr.mxu0 0.0
    %412 = vmatpush1.msra.mxu0 0.0
    %413 = vmatprep.subr.mxu0 0.0
    %414 = vmatpush1.msra.mxu0 0.0
    %415 = vmatprep.subr.mxu0 0.0
    %416 = vmatpush1.msra.mxu0 0.0
    %417 = vmatprep.subr.mxu0 0.0
    %418 = vmatpush1.msra.mxu0 0.0
    %419 = vmatprep.subr.mxu0 0.0
    %420 = vmatpush1.msra.mxu0 0.0
    %421 = vmatprep.subr.mxu0 0.0
    %422 = vmatpush1.msra.mxu0 0.0
    %423 = vmatprep.subr.mxu0 0.0
    %424 = vmatpush1.msra.mxu0 0.0
    %425 = vmatprep.subr.mxu0 0.0
    %426 = vmatpush1.msra.mxu0 0.0
    %427 = vmatprep.subr.mxu0 0.0
    %428 = vmatpush1.msra.mxu0 0.0
    %429 = vmatprep.subr.mxu0 0.0
    %430 = vmatpush1.msra.mxu0 0.0
    %431 = vmatprep.subr.mxu0 0.0
    %432 = vmatpush1.msra.mxu0 0.0
    %433 = vmatprep.subr.mxu0 0.0
    %434 = vmatpush1.msra.mxu0 0.0
    %435 = vmatprep.subr.mxu0 0.0
    %436 = vmatpush1.msra.mxu0 0.0
    %437 = vmatprep.subr.mxu0 0.0
    %438 = vmatpush1.msra.mxu0 0.0
    %439 = vmatprep.mubr.f32.mxu0 0.0
    %v440 = vand.u32 %v59, 4294901760
    %v441 = vsub.f32 %v59, %v440
    %v442 = vand.u32 %v441, 4294901760
    %443 = vmatmul.mubr.f32.gmra.mrb[0].mxu0 %v442
    %v444 = vpop.f32.mrb[0].mxu0
    %v445 = vadd.f32 %v349, %v444
    %v446 = vpop.f32.mrb[0].mxu0
    %447 = vmatprep.mubr.f32.mxu0 0.0
    %v448 = vand.u32 %v62, 4294901760
    %v449 = vsub.f32 %v62, %v448
    %v450 = vand.u32 %v449, 4294901760
    %451 = vmatmul.mubr.f32.gmra.mrb[0].mxu0 %v450
    %v452 = vpop.f32.mrb[0].mxu0
    %v453 = vadd.f32 %v356, %v452
    %v454 = vpop.f32.mrb[0].mxu0
    %455 = vmatprep.mubr.f32.mxu0 0.0
    %v456 = vand.u32 %v65, 4294901760
    %v457 = vsub.f32 %v65, %v456
    %v458 = vand.u32 %v457, 4294901760
    %459 = vmatmul.mubr.f32.gmra.mrb[0].mxu0 %v458
    %v460 = vpop.f32.mrb[0].mxu0
    %v461 = vadd.f32 %v363, %v460
    %v462 = vpop.f32.mrb[0].mxu0
    %463 = vmatprep.mubr.f32.mxu0 0.0
    %v464 = vand.u32 %v68, 4294901760
    %v465 = vsub.f32 %v68, %v464
    %v466 = vand.u32 %v465, 4294901760
    %467 = vmatmul.mubr.f32.gmra.mrb[0].mxu0 %v466
    %v468 = vpop.f32.mrb[0].mxu0
    %v469 = vadd.f32 %v370, %v468
    %v470 = vpop.f32.mrb[0].mxu0
    %471 = vdwg.mxu0
    %472 = vmatprep.subr.mxu0 0.0
    %v473 = vand.u32 %v27, 4294901760
    %v474 = vsub.f32 %v27, %v473
    %v475 = vand.u32 %v474, 4294901760
    %476 = vmatpush1.msra.mxu0 %v475
    %477 = vmatprep.subr.mxu0 0.0
    %v478 = vand.u32 %v28, 4294901760
    %v479 = vsub.f32 %v28, %v478
    %v480 = vand.u32 %v479, 4294901760
    %481 = vmatpush1.msra.mxu0 %v480
    %482 = vmatprep.subr.mxu0 0.0
    %483 = vmatpush1.msra.mxu0 0.0
    %484 = vmatprep.subr.mxu0 0.0
    %485 = vmatpush1.msra.mxu0 0.0
    %486 = vmatprep.subr.mxu0 0.0
    %487 = vmatpush1.msra.mxu0 0.0
    %488 = vmatprep.subr.mxu0 0.0
    %489 = vmatpush1.msra.mxu0 0.0
    %490 = vmatprep.subr.mxu0 0.0
    %491 = vmatpush1.msra.mxu0 0.0
    %492 = vmatprep.subr.mxu0 0.0
    %493 = vmatpush1.msra.mxu0 0.0
    %494 = vmatprep.subr.mxu0 0.0
    %495 = vmatpush1.msra.mxu0 0.0
    %496 = vmatprep.subr.mxu0 0.0
    %497 = vmatpush1.msra.mxu0 0.0
    %498 = vmatprep.subr.mxu0 0.0
    %499 = vmatpush1.msra.mxu0 0.0
    %500 = vmatprep.subr.mxu0 0.0
    %501 = vmatpush1.msra.mxu0 0.0
    %502 = vmatprep.subr.mxu0 0.0
    %503 = vmatpush1.msra.mxu0 0.0
    %504 = vmatprep.subr.mxu0 0.0
    %505 = vmatpush1.msra.mxu0 0.0
    %506 = vmatprep.subr.mxu0 0.0
    %507 = vmatpush1.msra.mxu0 0.0
    %508 = vmatprep.subr.mxu0 0.0
    %509 = vmatpush1.msra.mxu0 0.0
    %510 = vmatprep.subr.mxu0 0.0
    %511 = vmatpush1.msra.mxu0 0.0
    %512 = vmatprep.subr.mxu0 0.0
    %513 = vmatpush1.msra.mxu0 0.0
    %514 = vmatprep.subr.mxu0 0.0
    %515 = vmatpush1.msra.mxu0 0.0
    %516 = vmatprep.subr.mxu0 0.0
    %517 = vmatpush1.msra.mxu0 0.0
    %518 = vmatprep.subr.mxu0 0.0
    %519 = vmatpush1.msra.mxu0 0.0
    %520 = vmatprep.subr.mxu0 0.0
    %521 = vmatpush1.msra.mxu0 0.0
    %522 = vmatprep.subr.mxu0 0.0
    %523 = vmatpush1.msra.mxu0 0.0
    %524 = vmatprep.subr.mxu0 0.0
    %525 = vmatpush1.msra.mxu0 0.0
    %526 = vmatprep.subr.mxu0 0.0
    %527 = vmatpush1.msra.mxu0 0.0
    %528 = vmatprep.subr.mxu0 0.0
    %529 = vmatpush1.msra.mxu0 0.0
    %530 = vmatprep.subr.mxu0 0.0
    %531 = vmatpush1.msra.mxu0 0.0
    %532 = vmatprep.subr.mxu0 0.0
    %533 = vmatpush1.msra.mxu0 0.0
    %534 = vmatprep.subr.mxu0 0.0
    %535 = vmatpush1.msra.mxu0 0.0
    %536 = vmatprep.subr.mxu0 0.0
    %537 = vmatpush1.msra.mxu0 0.0
    %538 = vmatprep.subr.mxu0 0.0
    %539 = vmatpush1.msra.mxu0 0.0
    %540 = vmatprep.subr.mxu0 0.0
    %541 = vmatpush1.msra.mxu0 0.0
    %542 = vmatprep.mubr.f32.mxu0 0.0
    %v543 = vand.u32 %v59, 4294901760
    %544 = vmatmul.mubr.f32.gmra.mrb[0].mxu0 %v543
    %v545 = vpop.f32.mrb[0].mxu0
    %v546 = vadd.f32 %v445, %v545
    %v547 = vpop.f32.mrb[0].mxu0
    %548 = vmatprep.mubr.f32.mxu0 0.0
    %v549 = vand.u32 %v62, 4294901760
    %550 = vmatmul.mubr.f32.gmra.mrb[0].mxu0 %v549
    %v551 = vpop.f32.mrb[0].mxu0
    %v552 = vadd.f32 %v453, %v551
    %v553 = vpop.f32.mrb[0].mxu0
    %554 = vmatprep.mubr.f32.mxu0 0.0
    %v555 = vand.u32 %v65, 4294901760
    %556 = vmatmul.mubr.f32.gmra.mrb[0].mxu0 %v555
    %v557 = vpop.f32.mrb[0].mxu0
    %v558 = vadd.f32 %v461, %v557
    %v559 = vpop.f32.mrb[0].mxu0
    %560 = vmatprep.mubr.f32.mxu0 0.0
    %v561 = vand.u32 %v68, 4294901760
    %562 = vmatmul.mubr.f32.gmra.mrb[0].mxu0 %v561
    %v563 = vpop.f32.mrb[0].mxu0
    %v564 = vadd.f32 %v469, %v563
    %v565 = vpop.f32.mrb[0].mxu0
    %566 = vdwg.mxu0
    %567 = vmatprep.subr.mxu0 0.0
    %v568 = vand.u32 %v27, 4294901760
    %569 = vmatpush1.msra.mxu0 %v568
    %570 = vmatprep.subr.mxu0 0.0
    %v571 = vand.u32 %v28, 4294901760
    %572 = vmatpush1.msra.mxu0 %v571
    %573 = vmatprep.subr.mxu0 0.0
    %574 = vmatpush1.msra.mxu0 0.0
    %575 = vmatprep.subr.mxu0 0.0
    %576 = vmatpush1.msra.mxu0 0.0
    %577 = vmatprep.subr.mxu0 0.0
    %578 = vmatpush1.msra.mxu0 0.0
    %579 = vmatprep.subr.mxu0 0.0
    %580 = vmatpush1.msra.mxu0 0.0
    %581 = vmatprep.subr.mxu0 0.0
    %582 = vmatpush1.msra.mxu0 0.0
    %583 = vmatprep.subr.mxu0 0.0
    %584 = vmatpush1.msra.mxu0 0.0
    %585 = vmatprep.subr.mxu0 0.0
    %586 = vmatpush1.msra.mxu0 0.0
    %587 = vmatprep.subr.mxu0 0.0
    %588 = vmatpush1.msra.mxu0 0.0
    %589 = vmatprep.subr.mxu0 0.0
    %590 = vmatpush1.msra.mxu0 0.0
    %591 = vmatprep.subr.mxu0 0.0
    %592 = vmatpush1.msra.mxu0 0.0
    %593 = vmatprep.subr.mxu0 0.0
    %594 = vmatpush1.msra.mxu0 0.0
    %595 = vmatprep.subr.mxu0 0.0
    %596 = vmatpush1.msra.mxu0 0.0
    %597 = vmatprep.subr.mxu0 0.0
    %598 = vmatpush1.msra.mxu0 0.0
    %599 = vmatprep.subr.mxu0 0.0
    %600 = vmatpush1.msra.mxu0 0.0
    %601 = vmatprep.subr.mxu0 0.0
    %602 = vmatpush1.msra.mxu0 0.0
    %603 = vmatprep.subr.mxu0 0.0
    %604 = vmatpush1.msra.mxu0 0.0
    %605 = vmatprep.subr.mxu0 0.0
    %606 = vmatpush1.msra.mxu0 0.0
    %607 = vmatprep.subr.mxu0 0.0
    %608 = vmatpush1.msra.mxu0 0.0
    %609 = vmatprep.subr.mxu0 0.0
    %610 = vmatpush1.msra.mxu0 0.0
    %611 = vmatprep.subr.mxu0 0.0
    %612 = vmatpush1.msra.mxu0 0.0
    %613 = vmatprep.subr.mxu0 0.0
    %614 = vmatpush1.msra.mxu0 0.0
    %615 = vmatprep.subr.mxu0 0.0
    %616 = vmatpush1.msra.mxu0 0.0
    %617 = vmatprep.subr.mxu0 0.0
    %618 = vmatpush1.msra.mxu0 0.0
    %619 = vmatprep.subr.mxu0 0.0
    %620 = vmatpush1.msra.mxu0 0.0
    %621 = vmatprep.subr.mxu0 0.0
    %622 = vmatpush1.msra.mxu0 0.0
    %623 = vmatprep.subr.mxu0 0.0
    %624 = vmatpush1.msra.mxu0 0.0
    %625 = vmatprep.subr.mxu0 0.0
    %626 = vmatpush1.msra.mxu0 0.0
    %627 = vmatprep.subr.mxu0 0.0
    %628 = vmatpush1.msra.mxu0 0.0
    %629 = vmatprep.subr.mxu0 0.0
    %630 = vmatpush1.msra.mxu0 0.0
    %631 = vmatprep.subr.mxu0 0.0
    %632 = vmatpush1.msra.mxu0 0.0
    %633 = vmatprep.mubr.f32.mxu0 0.0
    %v634 = vand.u32 %v59, 4294901760
    %635 = vmatmul.mubr.f32.gmra.mrb[0].mxu0 %v634
    %v636 = vpop.f32.mrb[0].mxu0
    %v637 = vadd.f32 %v546, %v636
    %v638 = vpop.f32.mrb[0].mxu0
    %639 = vmatprep.mubr.f32.mxu0 0.0
    %v640 = vand.u32 %v62, 4294901760
    %641 = vmatmul.mubr.f32.gmra.mrb[0].mxu0 %v640
    %v642 = vpop.f32.mrb[0].mxu0
    %v643 = vadd.f32 %v552, %v642
    %v644 = vpop.f32.mrb[0].mxu0
    %645 = vmatprep.mubr.f32.mxu0 0.0
    %v646 = vand.u32 %v65, 4294901760
    %647 = vmatmul.mubr.f32.gmra.mrb[0].mxu0 %v646
    %v648 = vpop.f32.mrb[0].mxu0
    %v649 = vadd.f32 %v558, %v648
    %v650 = vpop.f32.mrb[0].mxu0
    %651 = vmatprep.mubr.f32.mxu0 0.0
    %v652 = vand.u32 %v68, 4294901760
    %653 = vmatmul.mubr.f32.gmra.mrb[0].mxu0 %v652
    %v654 = vpop.f32.mrb[0].mxu0
    %v655 = vadd.f32 %v564, %v654
    %v656 = vpop.f32.mrb[0].mxu0
    %657 = vdwg.mxu0
    %v658 = vmax.f32 %v637, 0.0
    %v659 = vmax.f32 %v643, 0.0
    %v660 = vmax.f32 %v649, 0.0
    %v661 = vmax.f32 %v655, 0.0
    %v662 = vld [vmem:[%s3] sm:$0xff]
    %v663 = vld [vmem:[%s3 + $0x8] sm:$0xff]
    %v664 = vld [vmem:[%s3 + $0x10] sm:$0xff]
    %v665 = vld [vmem:[%s3 + $0x18] sm:$0xff]
    %v666 = vld [vmem:[%s4] sm:$0xff]
    %v667 = vld [vmem:[%s4 + $0x8] sm:$0xff]
    %v668 = vld [vmem:[%s4 + $0x10] sm:$0xff]
    %v669 = vld [vmem:[%s4 + $0x18] sm:$0xff]
    %671 = vset.pattern.permute.xlu0 0
    %672 = vperm.xlu0 %671, %v666
    %v673 = vpop.permute.xlu0 %672
    %676 = vset.pattern.permute.xlu0 0
    %677 = vperm.xlu0 %676, %v667
    %v678 = vpop.permute.xlu0 %677
    %681 = vset.pattern.permute.xlu0 0
    %682 = vperm.xlu0 %681, %v668
    %v683 = vpop.permute.xlu0 %682
    %686 = vset.pattern.permute.xlu0 0
    %687 = vperm.xlu0 %686, %v669
    %v688 = vpop.permute.xlu0 %687
    %vm690 = vcmask 261120
    %v692 = vsel %vm690, %v662, 0
    %v695 = vsel %vm690, %v663, 0
    %v698 = vsel %vm690, %v664, 0
    %v701 = vsel %vm690, %v665, 0
    %703 = vmatprep.subr.mxu0 0.0
    %v704 = vand.u32 %v658, 4294901760
    %705 = vmatpush1.msra.mxu0 %v704
    %706 = vmatprep.subr.mxu0 0.0
    %v707 = vand.u32 %v659, 4294901760
    %708 = vmatpush1.msra.mxu0 %v707
    %709 = vmatprep.subr.mxu0 0.0
    %v710 = vand.u32 %v660, 4294901760
    %711 = vmatpush1.msra.mxu0 %v710
    %712 = vmatprep.subr.mxu0 0.0
    %v713 = vand.u32 %v661, 4294901760
    %714 = vmatpush1.msra.mxu0 %v713
    %715 = vmatprep.subr.mxu0 0.0
    %716 = vmatpush1.msra.mxu0 0.0
    %717 = vmatprep.subr.mxu0 0.0
    %718 = vmatpush1.msra.mxu0 0.0
    %719 = vmatprep.subr.mxu0 0.0
    %720 = vmatpush1.msra.mxu0 0.0
    %721 = vmatprep.subr.mxu0 0.0
    %722 = vmatpush1.msra.mxu0 0.0
    %723 = vmatprep.subr.mxu0 0.0
    %724 = vmatpush1.msra.mxu0 0.0
    %725 = vmatprep.subr.mxu0 0.0
    %726 = vmatpush1.msra.mxu0 0.0
    %727 = vmatprep.subr.mxu0 0.0
    %728 = vmatpush1.msra.mxu0 0.0
    %729 = vmatprep.subr.mxu0 0.0
    %730 = vmatpush1.msra.mxu0 0.0
    %731 = vmatprep.subr.mxu0 0.0
    %732 = vmatpush1.msra.mxu0 0.0
    %733 = vmatprep.subr.mxu0 0.0
    %734 = vmatpush1.msra.mxu0 0.0
    %735 = vmatprep.subr.mxu0 0.0
    %736 = vmatpush1.msra.mxu0 0.0
    %737 = vmatprep.subr.mxu0 0.0
    %738 = vmatpush1.msra.mxu0 0.0
    %739 = vmatprep.subr.mxu0 0.0
    %740 = vmatpush1.msra.mxu0 0.0
    %741 = vmatprep.subr.mxu0 0.0
    %742 = vmatpush1.msra.mxu0 0.0
    %743 = vmatprep.subr.mxu0 0.0
    %744 = vmatpush1.msra.mxu0 0.0
    %745 = vmatprep.subr.mxu0 0.0
    %746 = vmatpush1.msra.mxu0 0.0
    %747 = vmatprep.subr.mxu0 0.0
    %748 = vmatpush1.msra.mxu0 0.0
    %749 = vmatprep.subr.mxu0 0.0
    %750 = vmatpush1.msra.mxu0 0.0
    %751 = vmatprep.subr.mxu0 0.0
    %752 = vmatpush1.msra.mxu0 0.0
    %753 = vmatprep.subr.mxu0 0.0
    %754 = vmatpush1.msra.mxu0 0.0
    %755 = vmatprep.subr.mxu0 0.0
    %756 = vmatpush1.msra.mxu0 0.0
    %757 = vmatprep.subr.mxu0 0.0
    %758 = vmatpush1.msra.mxu0 0.0
    %759 = vmatprep.subr.mxu0 0.0
    %760 = vmatpush1.msra.mxu0 0.0
    %761 = vmatprep.subr.mxu0 0.0
    %762 = vmatpush1.msra.mxu0 0.0
    %763 = vmatprep.subr.mxu0 0.0
    %764 = vmatpush1.msra.mxu0 0.0
    %765 = vmatprep.subr.mxu0 0.0
    %766 = vmatpush1.msra.mxu0 0.0
    %767 = vmatprep.subr.mxu0 0.0
    %768 = vmatpush1.msra.mxu0 0.0
    %769 = vmatprep.subr.mxu0 0.0
    %770 = vmatpush1.msra.mxu0 0.0
    %771 = vmatprep.mubr.f32.mxu0 0.0
    %v772 = vand.u32 %v692, 4294901760
    %v773 = vsub.f32 %v692, %v772
    %v774 = vand.u32 %v773, 4294901760
    %v775 = vsub.f32 %v773, %v774
    %v776 = vand.u32 %v775, 4294901760
    %777 = vmatmul.mubr.f32.gmra.mrb[0].mxu0 %v776
    %v778 = vpop.f32.mrb[0].mxu0
    %v779 = vadd.f32 %v673, %v778
    %v780 = vpop.f32.mrb[0].mxu0
    %781 = vmatprep.mubr.f32.mxu0 0.0
    %v782 = vand.u32 %v695, 4294901760
    %v783 = vsub.f32 %v695, %v782
    %v784 = vand.u32 %v783, 4294901760
    %v785 = vsub.f32 %v783, %v784
    %v786 = vand.u32 %v785, 4294901760
    %787 = vmatmul.mubr.f32.gmra.mrb[0].mxu0 %v786
    %v788 = vpop.f32.mrb[0].mxu0
    %v789 = vadd.f32 %v678, %v788
    %v790 = vpop.f32.mrb[0].mxu0
    %791 = vmatprep.mubr.f32.mxu0 0.0
    %v792 = vand.u32 %v698, 4294901760
    %v793 = vsub.f32 %v698, %v792
    %v794 = vand.u32 %v793, 4294901760
    %v795 = vsub.f32 %v793, %v794
    %v796 = vand.u32 %v795, 4294901760
    %797 = vmatmul.mubr.f32.gmra.mrb[0].mxu0 %v796
    %v798 = vpop.f32.mrb[0].mxu0
    %v799 = vadd.f32 %v683, %v798
    %v800 = vpop.f32.mrb[0].mxu0
    %801 = vmatprep.mubr.f32.mxu0 0.0
    %v802 = vand.u32 %v701, 4294901760
    %v803 = vsub.f32 %v701, %v802
    %v804 = vand.u32 %v803, 4294901760
    %v805 = vsub.f32 %v803, %v804
    %v806 = vand.u32 %v805, 4294901760
    %807 = vmatmul.mubr.f32.gmra.mrb[0].mxu0 %v806
    %v808 = vpop.f32.mrb[0].mxu0
    %v809 = vadd.f32 %v688, %v808
    %v810 = vpop.f32.mrb[0].mxu0
    %811 = vdwg.mxu0
    %812 = vmatprep.subr.mxu0 0.0
    %v813 = vand.u32 %v658, 4294901760
    %v814 = vsub.f32 %v658, %v813
    %v815 = vand.u32 %v814, 4294901760
    %v816 = vsub.f32 %v814, %v815
    %v817 = vand.u32 %v816, 4294901760
    %818 = vmatpush1.msra.mxu0 %v817
    %819 = vmatprep.subr.mxu0 0.0
    %v820 = vand.u32 %v659, 4294901760
    %v821 = vsub.f32 %v659, %v820
    %v822 = vand.u32 %v821, 4294901760
    %v823 = vsub.f32 %v821, %v822
    %v824 = vand.u32 %v823, 4294901760
    %825 = vmatpush1.msra.mxu0 %v824
    %826 = vmatprep.subr.mxu0 0.0
    %v827 = vand.u32 %v660, 4294901760
    %v828 = vsub.f32 %v660, %v827
    %v829 = vand.u32 %v828, 4294901760
    %v830 = vsub.f32 %v828, %v829
    %v831 = vand.u32 %v830, 4294901760
    %832 = vmatpush1.msra.mxu0 %v831
    %833 = vmatprep.subr.mxu0 0.0
    %v834 = vand.u32 %v661, 4294901760
    %v835 = vsub.f32 %v661, %v834
    %v836 = vand.u32 %v835, 4294901760
    %v837 = vsub.f32 %v835, %v836
    %v838 = vand.u32 %v837, 4294901760
    %839 = vmatpush1.msra.mxu0 %v838
    %840 = vmatprep.subr.mxu0 0.0
    %841 = vmatpush1.msra.mxu0 0.0
    %842 = vmatprep.subr.mxu0 0.0
    %843 = vmatpush1.msra.mxu0 0.0
    %844 = vmatprep.subr.mxu0 0.0
    %845 = vmatpush1.msra.mxu0 0.0
    %846 = vmatprep.subr.mxu0 0.0
    %847 = vmatpush1.msra.mxu0 0.0
    %848 = vmatprep.subr.mxu0 0.0
    %849 = vmatpush1.msra.mxu0 0.0
    %850 = vmatprep.subr.mxu0 0.0
    %851 = vmatpush1.msra.mxu0 0.0
    %852 = vmatprep.subr.mxu0 0.0
    %853 = vmatpush1.msra.mxu0 0.0
    %854 = vmatprep.subr.mxu0 0.0
    %855 = vmatpush1.msra.mxu0 0.0
    %856 = vmatprep.subr.mxu0 0.0
    %857 = vmatpush1.msra.mxu0 0.0
    %858 = vmatprep.subr.mxu0 0.0
    %859 = vmatpush1.msra.mxu0 0.0
    %860 = vmatprep.subr.mxu0 0.0
    %861 = vmatpush1.msra.mxu0 0.0
    %862 = vmatprep.subr.mxu0 0.0
    %863 = vmatpush1.msra.mxu0 0.0
    %864 = vmatprep.subr.mxu0 0.0
    %865 = vmatpush1.msra.mxu0 0.0
    %866 = vmatprep.subr.mxu0 0.0
    %867 = vmatpush1.msra.mxu0 0.0
    %868 = vmatprep.subr.mxu0 0.0
    %869 = vmatpush1.msra.mxu0 0.0
    %870 = vmatprep.subr.mxu0 0.0
    %871 = vmatpush1.msra.mxu0 0.0
    %872 = vmatprep.subr.mxu0 0.0
    %873 = vmatpush1.msra.mxu0 0.0
    %874 = vmatprep.subr.mxu0 0.0
    %875 = vmatpush1.msra.mxu0 0.0
    %876 = vmatprep.subr.mxu0 0.0
    %877 = vmatpush1.msra.mxu0 0.0
    %878 = vmatprep.subr.mxu0 0.0
    %879 = vmatpush1.msra.mxu0 0.0
    %880 = vmatprep.subr.mxu0 0.0
    %881 = vmatpush1.msra.mxu0 0.0
    %882 = vmatprep.subr.mxu0 0.0
    %883 = vmatpush1.msra.mxu0 0.0
    %884 = vmatprep.subr.mxu0 0.0
    %885 = vmatpush1.msra.mxu0 0.0
    %886 = vmatprep.subr.mxu0 0.0
    %887 = vmatpush1.msra.mxu0 0.0
    %888 = vmatprep.subr.mxu0 0.0
    %889 = vmatpush1.msra.mxu0 0.0
    %890 = vmatprep.subr.mxu0 0.0
    %891 = vmatpush1.msra.mxu0 0.0
    %892 = vmatprep.subr.mxu0 0.0
    %893 = vmatpush1.msra.mxu0 0.0
    %894 = vmatprep.subr.mxu0 0.0
    %895 = vmatpush1.msra.mxu0 0.0
    %896 = vmatprep.mubr.f32.mxu0 0.0
    %v897 = vand.u32 %v692, 4294901760
    %898 = vmatmul.mubr.f32.gmra.mrb[0].mxu0 %v897
    %v899 = vpop.f32.mrb[0].mxu0
    %v900 = vadd.f32 %v779, %v899
    %v901 = vpop.f32.mrb[0].mxu0
    %902 = vmatprep.mubr.f32.mxu0 0.0
    %v903 = vand.u32 %v695, 4294901760
    %904 = vmatmul.mubr.f32.gmra.mrb[0].mxu0 %v903
    %v905 = vpop.f32.mrb[0].mxu0
    %v906 = vadd.f32 %v789, %v905
    %v907 = vpop.f32.mrb[0].mxu0
    %908 = vmatprep.mubr.f32.mxu0 0.0
    %v909 = vand.u32 %v698, 4294901760
    %910 = vmatmul.mubr.f32.gmra.mrb[0].mxu0 %v909
    %v911 = vpop.f32.mrb[0].mxu0
    %v912 = vadd.f32 %v799, %v911
    %v913 = vpop.f32.mrb[0].mxu0
    %914 = vmatprep.mubr.f32.mxu0 0.0
    %v915 = vand.u32 %v701, 4294901760
    %916 = vmatmul.mubr.f32.gmra.mrb[0].mxu0 %v915
    %v917 = vpop.f32.mrb[0].mxu0
    %v918 = vadd.f32 %v809, %v917
    %v919 = vpop.f32.mrb[0].mxu0
    %920 = vdwg.mxu0
    %921 = vmatprep.subr.mxu0 0.0
    %v922 = vand.u32 %v658, 4294901760
    %v923 = vsub.f32 %v658, %v922
    %924 = vmatpush1.msra.mxu0 %v923
    %925 = vmatprep.subr.mxu0 0.0
    %v926 = vand.u32 %v659, 4294901760
    %v927 = vsub.f32 %v659, %v926
    %928 = vmatpush1.msra.mxu0 %v927
    %929 = vmatprep.subr.mxu0 0.0
    %v930 = vand.u32 %v660, 4294901760
    %v931 = vsub.f32 %v660, %v930
    %932 = vmatpush1.msra.mxu0 %v931
    %933 = vmatprep.subr.mxu0 0.0
    %v934 = vand.u32 %v661, 4294901760
    %v935 = vsub.f32 %v661, %v934
    %936 = vmatpush1.msra.mxu0 %v935
    %937 = vmatprep.subr.mxu0 0.0
    %938 = vmatpush1.msra.mxu0 0.0
    %939 = vmatprep.subr.mxu0 0.0
    %940 = vmatpush1.msra.mxu0 0.0
    %941 = vmatprep.subr.mxu0 0.0
    %942 = vmatpush1.msra.mxu0 0.0
    %943 = vmatprep.subr.mxu0 0.0
    %944 = vmatpush1.msra.mxu0 0.0
    %945 = vmatprep.subr.mxu0 0.0
    %946 = vmatpush1.msra.mxu0 0.0
    %947 = vmatprep.subr.mxu0 0.0
    %948 = vmatpush1.msra.mxu0 0.0
    %949 = vmatprep.subr.mxu0 0.0
    %950 = vmatpush1.msra.mxu0 0.0
    %951 = vmatprep.subr.mxu0 0.0
    %952 = vmatpush1.msra.mxu0 0.0
    %953 = vmatprep.subr.mxu0 0.0
    %954 = vmatpush1.msra.mxu0 0.0
    %955 = vmatprep.subr.mxu0 0.0
    %956 = vmatpush1.msra.mxu0 0.0
    %957 = vmatprep.subr.mxu0 0.0
    %958 = vmatpush1.msra.mxu0 0.0
    %959 = vmatprep.subr.mxu0 0.0
    %960 = vmatpush1.msra.mxu0 0.0
    %961 = vmatprep.subr.mxu0 0.0
    %962 = vmatpush1.msra.mxu0 0.0
    %963 = vmatprep.subr.mxu0 0.0
    %964 = vmatpush1.msra.mxu0 0.0
    %965 = vmatprep.subr.mxu0 0.0
    %966 = vmatpush1.msra.mxu0 0.0
    %967 = vmatprep.subr.mxu0 0.0
    %968 = vmatpush1.msra.mxu0 0.0
    %969 = vmatprep.subr.mxu0 0.0
    %970 = vmatpush1.msra.mxu0 0.0
    %971 = vmatprep.subr.mxu0 0.0
    %972 = vmatpush1.msra.mxu0 0.0
    %973 = vmatprep.subr.mxu0 0.0
    %974 = vmatpush1.msra.mxu0 0.0
    %975 = vmatprep.subr.mxu0 0.0
    %976 = vmatpush1.msra.mxu0 0.0
    %977 = vmatprep.subr.mxu0 0.0
    %978 = vmatpush1.msra.mxu0 0.0
    %979 = vmatprep.subr.mxu0 0.0
    %980 = vmatpush1.msra.mxu0 0.0
    %981 = vmatprep.subr.mxu0 0.0
    %982 = vmatpush1.msra.mxu0 0.0
    %983 = vmatprep.subr.mxu0 0.0
    %984 = vmatpush1.msra.mxu0 0.0
    %985 = vmatprep.subr.mxu0 0.0
    %986 = vmatpush1.msra.mxu0 0.0
    %987 = vmatprep.subr.mxu0 0.0
    %988 = vmatpush1.msra.mxu0 0.0
    %989 = vmatprep.subr.mxu0 0.0
    %990 = vmatpush1.msra.mxu0 0.0
    %991 = vmatprep.subr.mxu0 0.0
    %992 = vmatpush1.msra.mxu0 0.0
    %993 = vmatprep.mubr.f32.mxu0 0.0
    %v994 = vand.u32 %v692, 4294901760
    %v995 = vsub.f32 %v692, %v994
    %996 = vmatmul.mubr.f32.gmra.mrb[0].mxu0 %v995
    %v997 = vpop.f32.mrb[0].mxu0
    %v998 = vadd.f32 %v900, %v997
    %v999 = vpop.f32.mrb[0].mxu0
    %1000 = vmatprep.mubr.f32.mxu0 0.0
    %v1001 = vand.u32 %v695, 4294901760
    %v1002 = vsub.f32 %v695, %v1001
    %1003 = vmatmul.mubr.f32.gmra.mrb[0].mxu0 %v1002
    %v1004 = vpop.f32.mrb[0].mxu0
    %v1005 = vadd.f32 %v906, %v1004
    %v1006 = vpop.f32.mrb[0].mxu0
    %1007 = vmatprep.mubr.f32.mxu0 0.0
    %v1008 = vand.u32 %v698, 4294901760
    %v1009 = vsub.f32 %v698, %v1008
    %1010 = vmatmul.mubr.f32.gmra.mrb[0].mxu0 %v1009
    %v1011 = vpop.f32.mrb[0].mxu0
    %v1012 = vadd.f32 %v912, %v1011
    %v1013 = vpop.f32.mrb[0].mxu0
    %1014 = vmatprep.mubr.f32.mxu0 0.0
    %v1015 = vand.u32 %v701, 4294901760
    %v1016 = vsub.f32 %v701, %v1015
    %1017 = vmatmul.mubr.f32.gmra.mrb[0].mxu0 %v1016
    %v1018 = vpop.f32.mrb[0].mxu0
    %v1019 = vadd.f32 %v918, %v1018
    %v1020 = vpop.f32.mrb[0].mxu0
    %1021 = vdwg.mxu0
    %1022 = vmatprep.subr.mxu0 0.0
    %v1023 = vand.u32 %v658, 4294901760
    %1024 = vmatpush1.msra.mxu0 %v1023
    %1025 = vmatprep.subr.mxu0 0.0
    %v1026 = vand.u32 %v659, 4294901760
    %1027 = vmatpush1.msra.mxu0 %v1026
    %1028 = vmatprep.subr.mxu0 0.0
    %v1029 = vand.u32 %v660, 4294901760
    %1030 = vmatpush1.msra.mxu0 %v1029
    %1031 = vmatprep.subr.mxu0 0.0
    %v1032 = vand.u32 %v661, 4294901760
    %1033 = vmatpush1.msra.mxu0 %v1032
    %1034 = vmatprep.subr.mxu0 0.0
    %1035 = vmatpush1.msra.mxu0 0.0
    %1036 = vmatprep.subr.mxu0 0.0
    %1037 = vmatpush1.msra.mxu0 0.0
    %1038 = vmatprep.subr.mxu0 0.0
    %1039 = vmatpush1.msra.mxu0 0.0
    %1040 = vmatprep.subr.mxu0 0.0
    %1041 = vmatpush1.msra.mxu0 0.0
    %1042 = vmatprep.subr.mxu0 0.0
    %1043 = vmatpush1.msra.mxu0 0.0
    %1044 = vmatprep.subr.mxu0 0.0
    %1045 = vmatpush1.msra.mxu0 0.0
    %1046 = vmatprep.subr.mxu0 0.0
    %1047 = vmatpush1.msra.mxu0 0.0
    %1048 = vmatprep.subr.mxu0 0.0
    %1049 = vmatpush1.msra.mxu0 0.0
    %1050 = vmatprep.subr.mxu0 0.0
    %1051 = vmatpush1.msra.mxu0 0.0
    %1052 = vmatprep.subr.mxu0 0.0
    %1053 = vmatpush1.msra.mxu0 0.0
    %1054 = vmatprep.subr.mxu0 0.0
    %1055 = vmatpush1.msra.mxu0 0.0
    %1056 = vmatprep.subr.mxu0 0.0
    %1057 = vmatpush1.msra.mxu0 0.0
    %1058 = vmatprep.subr.mxu0 0.0
    %1059 = vmatpush1.msra.mxu0 0.0
    %1060 = vmatprep.subr.mxu0 0.0
    %1061 = vmatpush1.msra.mxu0 0.0
    %1062 = vmatprep.subr.mxu0 0.0
    %1063 = vmatpush1.msra.mxu0 0.0
    %1064 = vmatprep.subr.mxu0 0.0
    %1065 = vmatpush1.msra.mxu0 0.0
    %1066 = vmatprep.subr.mxu0 0.0
    %1067 = vmatpush1.msra.mxu0 0.0
    %1068 = vmatprep.subr.mxu0 0.0
    %1069 = vmatpush1.msra.mxu0 0.0
    %1070 = vmatprep.subr.mxu0 0.0
    %1071 = vmatpush1.msra.mxu0 0.0
    %1072 = vmatprep.subr.mxu0 0.0
    %1073 = vmatpush1.msra.mxu0 0.0
    %1074 = vmatprep.subr.mxu0 0.0
    %1075 = vmatpush1.msra.mxu0 0.0
    %1076 = vmatprep.subr.mxu0 0.0
    %1077 = vmatpush1.msra.mxu0 0.0
    %1078 = vmatprep.subr.mxu0 0.0
    %1079 = vmatpush1.msra.mxu0 0.0
    %1080 = vmatprep.subr.mxu0 0.0
    %1081 = vmatpush1.msra.mxu0 0.0
    %1082 = vmatprep.subr.mxu0 0.0
    %1083 = vmatpush1.msra.mxu0 0.0
    %1084 = vmatprep.subr.mxu0 0.0
    %1085 = vmatpush1.msra.mxu0 0.0
    %1086 = vmatprep.subr.mxu0 0.0
    %1087 = vmatpush1.msra.mxu0 0.0
    %1088 = vmatprep.subr.mxu0 0.0
    %1089 = vmatpush1.msra.mxu0 0.0
    %1090 = vmatprep.mubr.f32.mxu0 0.0
    %v1091 = vand.u32 %v692, 4294901760
    %v1092 = vsub.f32 %v692, %v1091
    %v1093 = vand.u32 %v1092, 4294901760
    %1094 = vmatmul.mubr.f32.gmra.mrb[0].mxu0 %v1093
    %v1095 = vpop.f32.mrb[0].mxu0
    %v1096 = vadd.f32 %v998, %v1095
    %v1097 = vpop.f32.mrb[0].mxu0
    %1098 = vmatprep.mubr.f32.mxu0 0.0
    %v1099 = vand.u32 %v695, 4294901760
    %v1100 = vsub.f32 %v695, %v1099
    %v1101 = vand.u32 %v1100, 4294901760
    %1102 = vmatmul.mubr.f32.gmra.mrb[0].mxu0 %v1101
    %v1103 = vpop.f32.mrb[0].mxu0
    %v1104 = vadd.f32 %v1005, %v1103
    %v1105 = vpop.f32.mrb[0].mxu0
    %1106 = vmatprep.mubr.f32.mxu0 0.0
    %v1107 = vand.u32 %v698, 4294901760
    %v1108 = vsub.f32 %v698, %v1107
    %v1109 = vand.u32 %v1108, 4294901760
    %1110 = vmatmul.mubr.f32.gmra.mrb[0].mxu0 %v1109
    %v1111 = vpop.f32.mrb[0].mxu0
    %v1112 = vadd.f32 %v1012, %v1111
    %v1113 = vpop.f32.mrb[0].mxu0
    %1114 = vmatprep.mubr.f32.mxu0 0.0
    %v1115 = vand.u32 %v701, 4294901760
    %v1116 = vsub.f32 %v701, %v1115
    %v1117 = vand.u32 %v1116, 4294901760
    %1118 = vmatmul.mubr.f32.gmra.mrb[0].mxu0 %v1117
    %v1119 = vpop.f32.mrb[0].mxu0
    %v1120 = vadd.f32 %v1019, %v1119
    %v1121 = vpop.f32.mrb[0].mxu0
    %1122 = vdwg.mxu0
    %1123 = vmatprep.subr.mxu0 0.0
    %v1124 = vand.u32 %v658, 4294901760
    %v1125 = vsub.f32 %v658, %v1124
    %v1126 = vand.u32 %v1125, 4294901760
    %1127 = vmatpush1.msra.mxu0 %v1126
    %1128 = vmatprep.subr.mxu0 0.0
    %v1129 = vand.u32 %v659, 4294901760
    %v1130 = vsub.f32 %v659, %v1129
    %v1131 = vand.u32 %v1130, 4294901760
    %1132 = vmatpush1.msra.mxu0 %v1131
    %1133 = vmatprep.subr.mxu0 0.0
    %v1134 = vand.u32 %v660, 4294901760
    %v1135 = vsub.f32 %v660, %v1134
    %v1136 = vand.u32 %v1135, 4294901760
    %1137 = vmatpush1.msra.mxu0 %v1136
    %1138 = vmatprep.subr.mxu0 0.0
    %v1139 = vand.u32 %v661, 4294901760
    %v1140 = vsub.f32 %v661, %v1139
    %v1141 = vand.u32 %v1140, 4294901760
    %1142 = vmatpush1.msra.mxu0 %v1141
    %1143 = vmatprep.subr.mxu0 0.0
    %1144 = vmatpush1.msra.mxu0 0.0
    %1145 = vmatprep.subr.mxu0 0.0
    %1146 = vmatpush1.msra.mxu0 0.0
    %1147 = vmatprep.subr.mxu0 0.0
    %1148 = vmatpush1.msra.mxu0 0.0
    %1149 = vmatprep.subr.mxu0 0.0
    %1150 = vmatpush1.msra.mxu0 0.0
    %1151 = vmatprep.subr.mxu0 0.0
    %1152 = vmatpush1.msra.mxu0 0.0
    %1153 = vmatprep.subr.mxu0 0.0
    %1154 = vmatpush1.msra.mxu0 0.0
    %1155 = vmatprep.subr.mxu0 0.0
    %1156 = vmatpush1.msra.mxu0 0.0
    %1157 = vmatprep.subr.mxu0 0.0
    %1158 = vmatpush1.msra.mxu0 0.0
    %1159 = vmatprep.subr.mxu0 0.0
    %1160 = vmatpush1.msra.mxu0 0.0
    %1161 = vmatprep.subr.mxu0 0.0
    %1162 = vmatpush1.msra.mxu0 0.0
    %1163 = vmatprep.subr.mxu0 0.0
    %1164 = vmatpush1.msra.mxu0 0.0
    %1165 = vmatprep.subr.mxu0 0.0
    %1166 = vmatpush1.msra.mxu0 0.0
    %1167 = vmatprep.subr.mxu0 0.0
    %1168 = vmatpush1.msra.mxu0 0.0
    %1169 = vmatprep.subr.mxu0 0.0
    %1170 = vmatpush1.msra.mxu0 0.0
    %1171 = vmatprep.subr.mxu0 0.0
    %1172 = vmatpush1.msra.mxu0 0.0
    %1173 = vmatprep.subr.mxu0 0.0
    %1174 = vmatpush1.msra.mxu0 0.0
    %1175 = vmatprep.subr.mxu0 0.0
    %1176 = vmatpush1.msra.mxu0 0.0
    %1177 = vmatprep.subr.mxu0 0.0
    %1178 = vmatpush1.msra.mxu0 0.0
    %1179 = vmatprep.subr.mxu0 0.0
    %1180 = vmatpush1.msra.mxu0 0.0
    %1181 = vmatprep.subr.mxu0 0.0
    %1182 = vmatpush1.msra.mxu0 0.0
    %1183 = vmatprep.subr.mxu0 0.0
    %1184 = vmatpush1.msra.mxu0 0.0
    %1185 = vmatprep.subr.mxu0 0.0
    %1186 = vmatpush1.msra.mxu0 0.0
    %1187 = vmatprep.subr.mxu0 0.0
    %1188 = vmatpush1.msra.mxu0 0.0
    %1189 = vmatprep.subr.mxu0 0.0
    %1190 = vmatpush1.msra.mxu0 0.0
    %1191 = vmatprep.subr.mxu0 0.0
    %1192 = vmatpush1.msra.mxu0 0.0
    %1193 = vmatprep.subr.mxu0 0.0
    %1194 = vmatpush1.msra.mxu0 0.0
    %1195 = vmatprep.subr.mxu0 0.0
    %1196 = vmatpush1.msra.mxu0 0.0
    %1197 = vmatprep.subr.mxu0 0.0
    %1198 = vmatpush1.msra.mxu0 0.0
    %1199 = vmatprep.mubr.f32.mxu0 0.0
    %v1200 = vand.u32 %v692, 4294901760
    %1201 = vmatmul.mubr.f32.gmra.mrb[0].mxu0 %v1200
    %v1202 = vpop.f32.mrb[0].mxu0
    %v1203 = vadd.f32 %v1096, %v1202
    %v1204 = vpop.f32.mrb[0].mxu0
    %1205 = vmatprep.mubr.f32.mxu0 0.0
    %v1206 = vand.u32 %v695, 4294901760
    %1207 = vmatmul.mubr.f32.gmra.mrb[0].mxu0 %v1206
    %v1208 = vpop.f32.mrb[0].mxu0
    %v1209 = vadd.f32 %v1104, %v1208
    %v1210 = vpop.f32.mrb[0].mxu0
    %1211 = vmatprep.mubr.f32.mxu0 0.0
    %v1212 = vand.u32 %v698, 4294901760
    %1213 = vmatmul.mubr.f32.gmra.mrb[0].mxu0 %v1212
    %v1214 = vpop.f32.mrb[0].mxu0
    %v1215 = vadd.f32 %v1112, %v1214
    %v1216 = vpop.f32.mrb[0].mxu0
    %1217 = vmatprep.mubr.f32.mxu0 0.0
    %v1218 = vand.u32 %v701, 4294901760
    %1219 = vmatmul.mubr.f32.gmra.mrb[0].mxu0 %v1218
    %v1220 = vpop.f32.mrb[0].mxu0
    %v1221 = vadd.f32 %v1120, %v1220
    %v1222 = vpop.f32.mrb[0].mxu0
    %1223 = vdwg.mxu0
    %1224 = vmatprep.subr.mxu0 0.0
    %v1225 = vand.u32 %v658, 4294901760
    %1226 = vmatpush1.msra.mxu0 %v1225
    %1227 = vmatprep.subr.mxu0 0.0
    %v1228 = vand.u32 %v659, 4294901760
    %1229 = vmatpush1.msra.mxu0 %v1228
    %1230 = vmatprep.subr.mxu0 0.0
    %v1231 = vand.u32 %v660, 4294901760
    %1232 = vmatpush1.msra.mxu0 %v1231
    %1233 = vmatprep.subr.mxu0 0.0
    %v1234 = vand.u32 %v661, 4294901760
    %1235 = vmatpush1.msra.mxu0 %v1234
    %1236 = vmatprep.subr.mxu0 0.0
    %1237 = vmatpush1.msra.mxu0 0.0
    %1238 = vmatprep.subr.mxu0 0.0
    %1239 = vmatpush1.msra.mxu0 0.0
    %1240 = vmatprep.subr.mxu0 0.0
    %1241 = vmatpush1.msra.mxu0 0.0
    %1242 = vmatprep.subr.mxu0 0.0
    %1243 = vmatpush1.msra.mxu0 0.0
    %1244 = vmatprep.subr.mxu0 0.0
    %1245 = vmatpush1.msra.mxu0 0.0
    %1246 = vmatprep.subr.mxu0 0.0
    %1247 = vmatpush1.msra.mxu0 0.0
    %1248 = vmatprep.subr.mxu0 0.0
    %1249 = vmatpush1.msra.mxu0 0.0
    %1250 = vmatprep.subr.mxu0 0.0
    %1251 = vmatpush1.msra.mxu0 0.0
    %1252 = vmatprep.subr.mxu0 0.0
    %1253 = vmatpush1.msra.mxu0 0.0
    %1254 = vmatprep.subr.mxu0 0.0
    %1255 = vmatpush1.msra.mxu0 0.0
    %1256 = vmatprep.subr.mxu0 0.0
    %1257 = vmatpush1.msra.mxu0 0.0
    %1258 = vmatprep.subr.mxu0 0.0
    %1259 = vmatpush1.msra.mxu0 0.0
    %1260 = vmatprep.subr.mxu0 0.0
    %1261 = vmatpush1.msra.mxu0 0.0
    %1262 = vmatprep.subr.mxu0 0.0
    %1263 = vmatpush1.msra.mxu0 0.0
    %1264 = vmatprep.subr.mxu0 0.0
    %1265 = vmatpush1.msra.mxu0 0.0
    %1266 = vmatprep.subr.mxu0 0.0
    %1267 = vmatpush1.msra.mxu0 0.0
    %1268 = vmatprep.subr.mxu0 0.0
    %1269 = vmatpush1.msra.mxu0 0.0
    %1270 = vmatprep.subr.mxu0 0.0
    %1271 = vmatpush1.msra.mxu0 0.0
    %1272 = vmatprep.subr.mxu0 0.0
    %1273 = vmatpush1.msra.mxu0 0.0
    %1274 = vmatprep.subr.mxu0 0.0
    %1275 = vmatpush1.msra.mxu0 0.0
    %1276 = vmatprep.subr.mxu0 0.0
    %1277 = vmatpush1.msra.mxu0 0.0
    %1278 = vmatprep.subr.mxu0 0.0
    %1279 = vmatpush1.msra.mxu0 0.0
    %1280 = vmatprep.subr.mxu0 0.0
    %1281 = vmatpush1.msra.mxu0 0.0
    %1282 = vmatprep.subr.mxu0 0.0
    %1283 = vmatpush1.msra.mxu0 0.0
    %1284 = vmatprep.subr.mxu0 0.0
    %1285 = vmatpush1.msra.mxu0 0.0
    %1286 = vmatprep.subr.mxu0 0.0
    %1287 = vmatpush1.msra.mxu0 0.0
    %1288 = vmatprep.subr.mxu0 0.0
    %1289 = vmatpush1.msra.mxu0 0.0
    %1290 = vmatprep.subr.mxu0 0.0
    %1291 = vmatpush1.msra.mxu0 0.0
    %1292 = vmatprep.mubr.f32.mxu0 0.0
    %v1293 = vand.u32 %v692, 4294901760
    %1294 = vmatmul.mubr.f32.gmra.mrb[0].mxu0 %v1293
    %v1295 = vpop.f32.mrb[0].mxu0
    %v1296 = vadd.f32 %v1203, %v1295
    %v1297 = vpop.f32.mrb[0].mxu0
    %1298 = vmatprep.mubr.f32.mxu0 0.0
    %v1299 = vand.u32 %v695, 4294901760
    %1300 = vmatmul.mubr.f32.gmra.mrb[0].mxu0 %v1299
    %v1301 = vpop.f32.mrb[0].mxu0
    %v1302 = vadd.f32 %v1209, %v1301
    %v1303 = vpop.f32.mrb[0].mxu0
    %1304 = vmatprep.mubr.f32.mxu0 0.0
    %v1305 = vand.u32 %v698, 4294901760
    %1306 = vmatmul.mubr.f32.gmra.mrb[0].mxu0 %v1305
    %v1307 = vpop.f32.mrb[0].mxu0
    %v1308 = vadd.f32 %v1215, %v1307
    %v1309 = vpop.f32.mrb[0].mxu0
    %1310 = vmatprep.mubr.f32.mxu0 0.0
    %v1311 = vand.u32 %v701, 4294901760
    %1312 = vmatmul.mubr.f32.gmra.mrb[0].mxu0 %v1311
    %v1313 = vpop.f32.mrb[0].mxu0
    %v1314 = vadd.f32 %v1221, %v1313
    %v1315 = vpop.f32.mrb[0].mxu0
    %1316 = vdwg.mxu0
    %v1317 = vmax.f32 %v1296, 0.0
    %v1318 = vmax.f32 %v1302, 0.0
    %v1319 = vmax.f32 %v1308, 0.0
    %v1320 = vmax.f32 %v1314, 0.0
    %v1321 = vld [vmem:[%s5] sm:$0xff]
    %v1322 = vld [vmem:[%s6] sm:$0xff]
    %1324 = vset.pattern.permute.xlu0 0
    %1325 = vperm.xlu0 %1324, %v1322
    %v1326 = vpop.permute.xlu0 %1325
    %v1329 = vsel %vm690, %v1321, 0
    %1331 = vmatprep.subr.mxu0 0.0
    %v1332 = vand.u32 %v1317, 4294901760
    %1333 = vmatpush1.msra.mxu0 %v1332
    %1334 = vmatprep.subr.mxu0 0.0
    %v1335 = vand.u32 %v1318, 4294901760
    %1336 = vmatpush1.msra.mxu0 %v1335
    %1337 = vmatprep.subr.mxu0 0.0
    %v1338 = vand.u32 %v1319, 4294901760
    %1339 = vmatpush1.msra.mxu0 %v1338
    %1340 = vmatprep.subr.mxu0 0.0
    %v1341 = vand.u32 %v1320, 4294901760
    %1342 = vmatpush1.msra.mxu0 %v1341
    %1343 = vmatprep.subr.mxu0 0.0
    %1344 = vmatpush1.msra.mxu0 0.0
    %1345 = vmatprep.subr.mxu0 0.0
    %1346 = vmatpush1.msra.mxu0 0.0
    %1347 = vmatprep.subr.mxu0 0.0
    %1348 = vmatpush1.msra.mxu0 0.0
    %1349 = vmatprep.subr.mxu0 0.0
    %1350 = vmatpush1.msra.mxu0 0.0
    %1351 = vmatprep.subr.mxu0 0.0
    %1352 = vmatpush1.msra.mxu0 0.0
    %1353 = vmatprep.subr.mxu0 0.0
    %1354 = vmatpush1.msra.mxu0 0.0
    %1355 = vmatprep.subr.mxu0 0.0
    %1356 = vmatpush1.msra.mxu0 0.0
    %1357 = vmatprep.subr.mxu0 0.0
    %1358 = vmatpush1.msra.mxu0 0.0
    %1359 = vmatprep.subr.mxu0 0.0
    %1360 = vmatpush1.msra.mxu0 0.0
    %1361 = vmatprep.subr.mxu0 0.0
    %1362 = vmatpush1.msra.mxu0 0.0
    %1363 = vmatprep.subr.mxu0 0.0
    %1364 = vmatpush1.msra.mxu0 0.0
    %1365 = vmatprep.subr.mxu0 0.0
    %1366 = vmatpush1.msra.mxu0 0.0
    %1367 = vmatprep.subr.mxu0 0.0
    %1368 = vmatpush1.msra.mxu0 0.0
    %1369 = vmatprep.subr.mxu0 0.0
    %1370 = vmatpush1.msra.mxu0 0.0
    %1371 = vmatprep.subr.mxu0 0.0
    %1372 = vmatpush1.msra.mxu0 0.0
    %1373 = vmatprep.subr.mxu0 0.0
    %1374 = vmatpush1.msra.mxu0 0.0
    %1375 = vmatprep.subr.mxu0 0.0
    %1376 = vmatpush1.msra.mxu0 0.0
    %1377 = vmatprep.subr.mxu0 0.0
    %1378 = vmatpush1.msra.mxu0 0.0
    %1379 = vmatprep.subr.mxu0 0.0
    %1380 = vmatpush1.msra.mxu0 0.0
    %1381 = vmatprep.subr.mxu0 0.0
    %1382 = vmatpush1.msra.mxu0 0.0
    %1383 = vmatprep.subr.mxu0 0.0
    %1384 = vmatpush1.msra.mxu0 0.0
    %1385 = vmatprep.subr.mxu0 0.0
    %1386 = vmatpush1.msra.mxu0 0.0
    %1387 = vmatprep.subr.mxu0 0.0
    %1388 = vmatpush1.msra.mxu0 0.0
    %1389 = vmatprep.subr.mxu0 0.0
    %1390 = vmatpush1.msra.mxu0 0.0
    %1391 = vmatprep.subr.mxu0 0.0
    %1392 = vmatpush1.msra.mxu0 0.0
    %1393 = vmatprep.subr.mxu0 0.0
    %1394 = vmatpush1.msra.mxu0 0.0
    %1395 = vmatprep.subr.mxu0 0.0
    %1396 = vmatpush1.msra.mxu0 0.0
    %1397 = vmatprep.subr.mxu0 0.0
    %1398 = vmatpush1.msra.mxu0 0.0
    %1399 = vmatprep.mubr.f32.mxu0 0.0
    %v1400 = vand.u32 %v1329, 4294901760
    %v1401 = vsub.f32 %v1329, %v1400
    %v1402 = vand.u32 %v1401, 4294901760
    %v1403 = vsub.f32 %v1401, %v1402
    %v1404 = vand.u32 %v1403, 4294901760
    %1405 = vmatmul.mubr.f32.gmra.mrb[0].mxu0 %v1404
    %v1406 = vpop.f32.mrb[0].mxu0
    %v1407 = vadd.f32 %v1326, %v1406
    %v1408 = vpop.f32.mrb[0].mxu0
    %1409 = vdwg.mxu0
    %1410 = vmatprep.subr.mxu0 0.0
    %v1411 = vand.u32 %v1317, 4294901760
    %v1412 = vsub.f32 %v1317, %v1411
    %v1413 = vand.u32 %v1412, 4294901760
    %v1414 = vsub.f32 %v1412, %v1413
    %v1415 = vand.u32 %v1414, 4294901760
    %1416 = vmatpush1.msra.mxu0 %v1415
    %1417 = vmatprep.subr.mxu0 0.0
    %v1418 = vand.u32 %v1318, 4294901760
    %v1419 = vsub.f32 %v1318, %v1418
    %v1420 = vand.u32 %v1419, 4294901760
    %v1421 = vsub.f32 %v1419, %v1420
    %v1422 = vand.u32 %v1421, 4294901760
    %1423 = vmatpush1.msra.mxu0 %v1422
    %1424 = vmatprep.subr.mxu0 0.0
    %v1425 = vand.u32 %v1319, 4294901760
    %v1426 = vsub.f32 %v1319, %v1425
    %v1427 = vand.u32 %v1426, 4294901760
    %v1428 = vsub.f32 %v1426, %v1427
    %v1429 = vand.u32 %v1428, 4294901760
    %1430 = vmatpush1.msra.mxu0 %v1429
    %1431 = vmatprep.subr.mxu0 0.0
    %v1432 = vand.u32 %v1320, 4294901760
    %v1433 = vsub.f32 %v1320, %v1432
    %v1434 = vand.u32 %v1433, 4294901760
    %v1435 = vsub.f32 %v1433, %v1434
    %v1436 = vand.u32 %v1435, 4294901760
    %1437 = vmatpush1.msra.mxu0 %v1436
    %1438 = vmatprep.subr.mxu0 0.0
    %1439 = vmatpush1.msra.mxu0 0.0
    %1440 = vmatprep.subr.mxu0 0.0
    %1441 = vmatpush1.msra.mxu0 0.0
    %1442 = vmatprep.subr.mxu0 0.0
    %1443 = vmatpush1.msra.mxu0 0.0
    %1444 = vmatprep.subr.mxu0 0.0
    %1445 = vmatpush1.msra.mxu0 0.0
    %1446 = vmatprep.subr.mxu0 0.0
    %1447 = vmatpush1.msra.mxu0 0.0
    %1448 = vmatprep.subr.mxu0 0.0
    %1449 = vmatpush1.msra.mxu0 0.0
    %1450 = vmatprep.subr.mxu0 0.0
    %1451 = vmatpush1.msra.mxu0 0.0
    %1452 = vmatprep.subr.mxu0 0.0
    %1453 = vmatpush1.msra.mxu0 0.0
    %1454 = vmatprep.subr.mxu0 0.0
    %1455 = vmatpush1.msra.mxu0 0.0
    %1456 = vmatprep.subr.mxu0 0.0
    %1457 = vmatpush1.msra.mxu0 0.0
    %1458 = vmatprep.subr.mxu0 0.0
    %1459 = vmatpush1.msra.mxu0 0.0
    %1460 = vmatprep.subr.mxu0 0.0
    %1461 = vmatpush1.msra.mxu0 0.0
    %1462 = vmatprep.subr.mxu0 0.0
    %1463 = vmatpush1.msra.mxu0 0.0
    %1464 = vmatprep.subr.mxu0 0.0
    %1465 = vmatpush1.msra.mxu0 0.0
    %1466 = vmatprep.subr.mxu0 0.0
    %1467 = vmatpush1.msra.mxu0 0.0
    %1468 = vmatprep.subr.mxu0 0.0
    %1469 = vmatpush1.msra.mxu0 0.0
    %1470 = vmatprep.subr.mxu0 0.0
    %1471 = vmatpush1.msra.mxu0 0.0
    %1472 = vmatprep.subr.mxu0 0.0
    %1473 = vmatpush1.msra.mxu0 0.0
    %1474 = vmatprep.subr.mxu0 0.0
    %1475 = vmatpush1.msra.mxu0 0.0
    %1476 = vmatprep.subr.mxu0 0.0
    %1477 = vmatpush1.msra.mxu0 0.0
    %1478 = vmatprep.subr.mxu0 0.0
    %1479 = vmatpush1.msra.mxu0 0.0
    %1480 = vmatprep.subr.mxu0 0.0
    %1481 = vmatpush1.msra.mxu0 0.0
    %1482 = vmatprep.subr.mxu0 0.0
    %1483 = vmatpush1.msra.mxu0 0.0
    %1484 = vmatprep.subr.mxu0 0.0
    %1485 = vmatpush1.msra.mxu0 0.0
    %1486 = vmatprep.subr.mxu0 0.0
    %1487 = vmatpush1.msra.mxu0 0.0
    %1488 = vmatprep.subr.mxu0 0.0
    %1489 = vmatpush1.msra.mxu0 0.0
    %1490 = vmatprep.subr.mxu0 0.0
    %1491 = vmatpush1.msra.mxu0 0.0
    %1492 = vmatprep.subr.mxu0 0.0
    %1493 = vmatpush1.msra.mxu0 0.0
    %1494 = vmatprep.mubr.f32.mxu0 0.0
    %v1495 = vand.u32 %v1329, 4294901760
    %1496 = vmatmul.mubr.f32.gmra.mrb[0].mxu0 %v1495
    %v1497 = vpop.f32.mrb[0].mxu0
    %v1498 = vadd.f32 %v1407, %v1497
    %v1499 = vpop.f32.mrb[0].mxu0
    %1500 = vdwg.mxu0
    %1501 = vmatprep.subr.mxu0 0.0
    %v1502 = vand.u32 %v1317, 4294901760
    %v1503 = vsub.f32 %v1317, %v1502
    %1504 = vmatpush1.msra.mxu0 %v1503
    %1505 = vmatprep.subr.mxu0 0.0
    %v1506 = vand.u32 %v1318, 4294901760
    %v1507 = vsub.f32 %v1318, %v1506
    %1508 = vmatpush1.msra.mxu0 %v1507
    %1509 = vmatprep.subr.mxu0 0.0
    %v1510 = vand.u32 %v1319, 4294901760
    %v1511 = vsub.f32 %v1319, %v1510
    %1512 = vmatpush1.msra.mxu0 %v1511
    %1513 = vmatprep.subr.mxu0 0.0
    %v1514 = vand.u32 %v1320, 4294901760
    %v1515 = vsub.f32 %v1320, %v1514
    %1516 = vmatpush1.msra.mxu0 %v1515
    %1517 = vmatprep.subr.mxu0 0.0
    %1518 = vmatpush1.msra.mxu0 0.0
    %1519 = vmatprep.subr.mxu0 0.0
    %1520 = vmatpush1.msra.mxu0 0.0
    %1521 = vmatprep.subr.mxu0 0.0
    %1522 = vmatpush1.msra.mxu0 0.0
    %1523 = vmatprep.subr.mxu0 0.0
    %1524 = vmatpush1.msra.mxu0 0.0
    %1525 = vmatprep.subr.mxu0 0.0
    %1526 = vmatpush1.msra.mxu0 0.0
    %1527 = vmatprep.subr.mxu0 0.0
    %1528 = vmatpush1.msra.mxu0 0.0
    %1529 = vmatprep.subr.mxu0 0.0
    %1530 = vmatpush1.msra.mxu0 0.0
    %1531 = vmatprep.subr.mxu0 0.0
    %1532 = vmatpush1.msra.mxu0 0.0
    %1533 = vmatprep.subr.mxu0 0.0
    %1534 = vmatpush1.msra.mxu0 0.0
    %1535 = vmatprep.subr.mxu0 0.0
    %1536 = vmatpush1.msra.mxu0 0.0
    %1537 = vmatprep.subr.mxu0 0.0
    %1538 = vmatpush1.msra.mxu0 0.0
    %1539 = vmatprep.subr.mxu0 0.0
    %1540 = vmatpush1.msra.mxu0 0.0
    %1541 = vmatprep.subr.mxu0 0.0
    %1542 = vmatpush1.msra.mxu0 0.0
    %1543 = vmatprep.subr.mxu0 0.0
    %1544 = vmatpush1.msra.mxu0 0.0
    %1545 = vmatprep.subr.mxu0 0.0
    %1546 = vmatpush1.msra.mxu0 0.0
    %1547 = vmatprep.subr.mxu0 0.0
    %1548 = vmatpush1.msra.mxu0 0.0
    %1549 = vmatprep.subr.mxu0 0.0
    %1550 = vmatpush1.msra.mxu0 0.0
    %1551 = vmatprep.subr.mxu0 0.0
    %1552 = vmatpush1.msra.mxu0 0.0
    %1553 = vmatprep.subr.mxu0 0.0
    %1554 = vmatpush1.msra.mxu0 0.0
    %1555 = vmatprep.subr.mxu0 0.0
    %1556 = vmatpush1.msra.mxu0 0.0
    %1557 = vmatprep.subr.mxu0 0.0
    %1558 = vmatpush1.msra.mxu0 0.0
    %1559 = vmatprep.subr.mxu0 0.0
    %1560 = vmatpush1.msra.mxu0 0.0
    %1561 = vmatprep.subr.mxu0 0.0
    %1562 = vmatpush1.msra.mxu0 0.0
    %1563 = vmatprep.subr.mxu0 0.0
    %1564 = vmatpush1.msra.mxu0 0.0
    %1565 = vmatprep.subr.mxu0 0.0
    %1566 = vmatpush1.msra.mxu0 0.0
    %1567 = vmatprep.subr.mxu0 0.0
    %1568 = vmatpush1.msra.mxu0 0.0
    %1569 = vmatprep.subr.mxu0 0.0
    %1570 = vmatpush1.msra.mxu0 0.0
    %1571 = vmatprep.subr.mxu0 0.0
    %1572 = vmatpush1.msra.mxu0 0.0
    %1573 = vmatprep.mubr.f32.mxu0 0.0
    %v1574 = vand.u32 %v1329, 4294901760
    %v1575 = vsub.f32 %v1329, %v1574
    %1576 = vmatmul.mubr.f32.gmra.mrb[0].mxu0 %v1575
    %v1577 = vpop.f32.mrb[0].mxu0
    %v1578 = vadd.f32 %v1498, %v1577
    %v1579 = vpop.f32.mrb[0].mxu0
    %1580 = vdwg.mxu0
    %1581 = vmatprep.subr.mxu0 0.0
    %v1582 = vand.u32 %v1317, 4294901760
    %1583 = vmatpush1.msra.mxu0 %v1582
    %1584 = vmatprep.subr.mxu0 0.0
    %v1585 = vand.u32 %v1318, 4294901760
    %1586 = vmatpush1.msra.mxu0 %v1585
    %1587 = vmatprep.subr.mxu0 0.0
    %v1588 = vand.u32 %v1319, 4294901760
    %1589 = vmatpush1.msra.mxu0 %v1588
    %1590 = vmatprep.subr.mxu0 0.0
    %v1591 = vand.u32 %v1320, 4294901760
    %1592 = vmatpush1.msra.mxu0 %v1591
    %1593 = vmatprep.subr.mxu0 0.0
    %1594 = vmatpush1.msra.mxu0 0.0
    %1595 = vmatprep.subr.mxu0 0.0
    %1596 = vmatpush1.msra.mxu0 0.0
    %1597 = vmatprep.subr.mxu0 0.0
    %1598 = vmatpush1.msra.mxu0 0.0
    %1599 = vmatprep.subr.mxu0 0.0
    %1600 = vmatpush1.msra.mxu0 0.0
    %1601 = vmatprep.subr.mxu0 0.0
    %1602 = vmatpush1.msra.mxu0 0.0
    %1603 = vmatprep.subr.mxu0 0.0
    %1604 = vmatpush1.msra.mxu0 0.0
    %1605 = vmatprep.subr.mxu0 0.0
    %1606 = vmatpush1.msra.mxu0 0.0
    %1607 = vmatprep.subr.mxu0 0.0
    %1608 = vmatpush1.msra.mxu0 0.0
    %1609 = vmatprep.subr.mxu0 0.0
    %1610 = vmatpush1.msra.mxu0 0.0
    %1611 = vmatprep.subr.mxu0 0.0
    %1612 = vmatpush1.msra.mxu0 0.0
    %1613 = vmatprep.subr.mxu0 0.0
    %1614 = vmatpush1.msra.mxu0 0.0
    %1615 = vmatprep.subr.mxu0 0.0
    %1616 = vmatpush1.msra.mxu0 0.0
    %1617 = vmatprep.subr.mxu0 0.0
    %1618 = vmatpush1.msra.mxu0 0.0
    %1619 = vmatprep.subr.mxu0 0.0
    %1620 = vmatpush1.msra.mxu0 0.0
    %1621 = vmatprep.subr.mxu0 0.0
    %1622 = vmatpush1.msra.mxu0 0.0
    %1623 = vmatprep.subr.mxu0 0.0
    %1624 = vmatpush1.msra.mxu0 0.0
    %1625 = vmatprep.subr.mxu0 0.0
    %1626 = vmatpush1.msra.mxu0 0.0
    %1627 = vmatprep.subr.mxu0 0.0
    %1628 = vmatpush1.msra.mxu0 0.0
    %1629 = vmatprep.subr.mxu0 0.0
    %1630 = vmatpush1.msra.mxu0 0.0
    %1631 = vmatprep.subr.mxu0 0.0
    %1632 = vmatpush1.msra.mxu0 0.0
    %1633 = vmatprep.subr.mxu0 0.0
    %1634 = vmatpush1.msra.mxu0 0.0
    %1635 = vmatprep.subr.mxu0 0.0
    %1636 = vmatpush1.msra.mxu0 0.0
    %1637 = vmatprep.subr.mxu0 0.0
    %1638 = vmatpush1.msra.mxu0 0.0
    %1639 = vmatprep.subr.mxu0 0.0
    %1640 = vmatpush1.msra.mxu0 0.0
    %1641 = vmatprep.subr.mxu0 0.0
    %1642 = vmatpush1.msra.mxu0 0.0
    %1643 = vmatprep.subr.mxu0 0.0
    %1644 = vmatpush1.msra.mxu0 0.0
    %1645 = vmatprep.subr.mxu0 0.0
    %1646 = vmatpush1.msra.mxu0 0.0
    %1647 = vmatprep.subr.mxu0 0.0
    %1648 = vmatpush1.msra.mxu0 0.0
    %1649 = vmatprep.mubr.f32.mxu0 0.0
    %v1650 = vand.u32 %v1329, 4294901760
    %v1651 = vsub.f32 %v1329, %v1650
    %v1652 = vand.u32 %v1651, 4294901760
    %1653 = vmatmul.mubr.f32.gmra.mrb[0].mxu0 %v1652
    %v1654 = vpop.f32.mrb[0].mxu0
    %v1655 = vadd.f32 %v1578, %v1654
    %v1656 = vpop.f32.mrb[0].mxu0
    %1657 = vdwg.mxu0
    %1658 = vmatprep.subr.mxu0 0.0
    %v1659 = vand.u32 %v1317, 4294901760
    %v1660 = vsub.f32 %v1317, %v1659
    %v1661 = vand.u32 %v1660, 4294901760
    %1662 = vmatpush1.msra.mxu0 %v1661
    %1663 = vmatprep.subr.mxu0 0.0
    %v1664 = vand.u32 %v1318, 4294901760
    %v1665 = vsub.f32 %v1318, %v1664
    %v1666 = vand.u32 %v1665, 4294901760
    %1667 = vmatpush1.msra.mxu0 %v1666
    %1668 = vmatprep.subr.mxu0 0.0
    %v1669 = vand.u32 %v1319, 4294901760
    %v1670 = vsub.f32 %v1319, %v1669
    %v1671 = vand.u32 %v1670, 4294901760
    %1672 = vmatpush1.msra.mxu0 %v1671
    %1673 = vmatprep.subr.mxu0 0.0
    %v1674 = vand.u32 %v1320, 4294901760
    %v1675 = vsub.f32 %v1320, %v1674
    %v1676 = vand.u32 %v1675, 4294901760
    %1677 = vmatpush1.msra.mxu0 %v1676
    %1678 = vmatprep.subr.mxu0 0.0
    %1679 = vmatpush1.msra.mxu0 0.0
    %1680 = vmatprep.subr.mxu0 0.0
    %1681 = vmatpush1.msra.mxu0 0.0
    %1682 = vmatprep.subr.mxu0 0.0
    %1683 = vmatpush1.msra.mxu0 0.0
    %1684 = vmatprep.subr.mxu0 0.0
    %1685 = vmatpush1.msra.mxu0 0.0
    %1686 = vmatprep.subr.mxu0 0.0
    %1687 = vmatpush1.msra.mxu0 0.0
    %1688 = vmatprep.subr.mxu0 0.0
    %1689 = vmatpush1.msra.mxu0 0.0
    %1690 = vmatprep.subr.mxu0 0.0
    %1691 = vmatpush1.msra.mxu0 0.0
    %1692 = vmatprep.subr.mxu0 0.0
    %1693 = vmatpush1.msra.mxu0 0.0
    %1694 = vmatprep.subr.mxu0 0.0
    %1695 = vmatpush1.msra.mxu0 0.0
    %1696 = vmatprep.subr.mxu0 0.0
    %1697 = vmatpush1.msra.mxu0 0.0
    %1698 = vmatprep.subr.mxu0 0.0
    %1699 = vmatpush1.msra.mxu0 0.0
    %1700 = vmatprep.subr.mxu0 0.0
    %1701 = vmatpush1.msra.mxu0 0.0
    %1702 = vmatprep.subr.mxu0 0.0
    %1703 = vmatpush1.msra.mxu0 0.0
    %1704 = vmatprep.subr.mxu0 0.0
    %1705 = vmatpush1.msra.mxu0 0.0
    %1706 = vmatprep.subr.mxu0 0.0
    %1707 = vmatpush1.msra.mxu0 0.0
    %1708 = vmatprep.subr.mxu0 0.0
    %1709 = vmatpush1.msra.mxu0 0.0
    %1710 = vmatprep.subr.mxu0 0.0
    %1711 = vmatpush1.msra.mxu0 0.0
    %1712 = vmatprep.subr.mxu0 0.0
    %1713 = vmatpush1.msra.mxu0 0.0
    %1714 = vmatprep.subr.mxu0 0.0
    %1715 = vmatpush1.msra.mxu0 0.0
    %1716 = vmatprep.subr.mxu0 0.0
    %1717 = vmatpush1.msra.mxu0 0.0
    %1718 = vmatprep.subr.mxu0 0.0
    %1719 = vmatpush1.msra.mxu0 0.0
    %1720 = vmatprep.subr.mxu0 0.0
    %1721 = vmatpush1.msra.mxu0 0.0
    %1722 = vmatprep.subr.mxu0 0.0
    %1723 = vmatpush1.msra.mxu0 0.0
    %1724 = vmatprep.subr.mxu0 0.0
    %1725 = vmatpush1.msra.mxu0 0.0
    %1726 = vmatprep.subr.mxu0 0.0
    %1727 = vmatpush1.msra.mxu0 0.0
    %1728 = vmatprep.subr.mxu0 0.0
    %1729 = vmatpush1.msra.mxu0 0.0
    %1730 = vmatprep.subr.mxu0 0.0
    %1731 = vmatpush1.msra.mxu0 0.0
    %1732 = vmatprep.subr.mxu0 0.0
    %1733 = vmatpush1.msra.mxu0 0.0
    %1734 = vmatprep.mubr.f32.mxu0 0.0
    %v1735 = vand.u32 %v1329, 4294901760
    %1736 = vmatmul.mubr.f32.gmra.mrb[0].mxu0 %v1735
    %v1737 = vpop.f32.mrb[0].mxu0
    %v1738 = vadd.f32 %v1655, %v1737
    %v1739 = vpop.f32.mrb[0].mxu0
    %1740 = vdwg.mxu0
    %1741 = vmatprep.subr.mxu0 0.0
    %v1742 = vand.u32 %v1317, 4294901760
    %1743 = vmatpush1.msra.mxu0 %v1742
    %1744 = vmatprep.subr.mxu0 0.0
    %v1745 = vand.u32 %v1318, 4294901760
    %1746 = vmatpush1.msra.mxu0 %v1745
    %1747 = vmatprep.subr.mxu0 0.0
    %v1748 = vand.u32 %v1319, 4294901760
    %1749 = vmatpush1.msra.mxu0 %v1748
    %1750 = vmatprep.subr.mxu0 0.0
    %v1751 = vand.u32 %v1320, 4294901760
    %1752 = vmatpush1.msra.mxu0 %v1751
    %1753 = vmatprep.subr.mxu0 0.0
    %1754 = vmatpush1.msra.mxu0 0.0
    %1755 = vmatprep.subr.mxu0 0.0
    %1756 = vmatpush1.msra.mxu0 0.0
    %1757 = vmatprep.subr.mxu0 0.0
    %1758 = vmatpush1.msra.mxu0 0.0
    %1759 = vmatprep.subr.mxu0 0.0
    %1760 = vmatpush1.msra.mxu0 0.0
    %1761 = vmatprep.subr.mxu0 0.0
    %1762 = vmatpush1.msra.mxu0 0.0
    %1763 = vmatprep.subr.mxu0 0.0
    %1764 = vmatpush1.msra.mxu0 0.0
    %1765 = vmatprep.subr.mxu0 0.0
    %1766 = vmatpush1.msra.mxu0 0.0
    %1767 = vmatprep.subr.mxu0 0.0
    %1768 = vmatpush1.msra.mxu0 0.0
    %1769 = vmatprep.subr.mxu0 0.0
    %1770 = vmatpush1.msra.mxu0 0.0
    %1771 = vmatprep.subr.mxu0 0.0
    %1772 = vmatpush1.msra.mxu0 0.0
    %1773 = vmatprep.subr.mxu0 0.0
    %1774 = vmatpush1.msra.mxu0 0.0
    %1775 = vmatprep.subr.mxu0 0.0
    %1776 = vmatpush1.msra.mxu0 0.0
    %1777 = vmatprep.subr.mxu0 0.0
    %1778 = vmatpush1.msra.mxu0 0.0
    %1779 = vmatprep.subr.mxu0 0.0
    %1780 = vmatpush1.msra.mxu0 0.0
    %1781 = vmatprep.subr.mxu0 0.0
    %1782 = vmatpush1.msra.mxu0 0.0
    %1783 = vmatprep.subr.mxu0 0.0
    %1784 = vmatpush1.msra.mxu0 0.0
    %1785 = vmatprep.subr.mxu0 0.0
    %1786 = vmatpush1.msra.mxu0 0.0
    %1787 = vmatprep.subr.mxu0 0.0
    %1788 = vmatpush1.msra.mxu0 0.0
    %1789 = vmatprep.subr.mxu0 0.0
    %1790 = vmatpush1.msra.mxu0 0.0
    %1791 = vmatprep.subr.mxu0 0.0
    %1792 = vmatpush1.msra.mxu0 0.0
    %1793 = vmatprep.subr.mxu0 0.0
    %1794 = vmatpush1.msra.mxu0 0.0
    %1795 = vmatprep.subr.mxu0 0.0
    %1796 = vmatpush1.msra.mxu0 0.0
    %1797 = vmatprep.subr.mxu0 0.0
    %1798 = vmatpush1.msra.mxu0 0.0
    %1799 = vmatprep.subr.mxu0 0.0
    %1800 = vmatpush1.msra.mxu0 0.0
    %1801 = vmatprep.subr.mxu0 0.0
    %1802 = vmatpush1.msra.mxu0 0.0
    %1803 = vmatprep.subr.mxu0 0.0
    %1804 = vmatpush1.msra.mxu0 0.0
    %1805 = vmatprep.subr.mxu0 0.0
    %1806 = vmatpush1.msra.mxu0 0.0
    %1807 = vmatprep.subr.mxu0 0.0
    %1808 = vmatpush1.msra.mxu0 0.0
    %1809 = vmatprep.mubr.f32.mxu0 0.0
    %v1810 = vand.u32 %v1329, 4294901760
    %1811 = vmatmul.mubr.f32.gmra.mrb[0].mxu0 %v1810
    %v1812 = vpop.f32.mrb[0].mxu0
    %v1813 = vadd.f32 %v1738, %v1812
    %v1814 = vpop.f32.mrb[0].mxu0
    %1815 = vdwg.mxu0
    %1816 = vst [vmem:[#allocation2] sm:$0xff] %v1813
    // Predicated region
    $region30: #{tpu_custom_call.1} parent=1 // pred_check
      _
    $region31: #{tpu_custom_call.1} parent=1 // pred_check_branch
      %1818 = sbr.rel (0) target = $region33
    $region32: #{tpu_custom_call.1} parent=1 // pred_region
      %s1820 = ssub.s32 128, 128
      %1821 = vsyncadd [#allocation3], %s1820
      %s1823 = sshll.u32 [#allocation2], 4
      %s1824 = int_to_ptr.vmem [resolvable:$true] %s1823
      %1826 = dma.vmem_to_hbm [thread:$0]  %s1824, 128, %s7, [#allocation3]
    $region33: #{tpu_custom_call.1} parent=1 // pred_fallthru
      _
    // Predicated region
    $region34: #{tpu_custom_call.1} parent=1 // pred_check
      _
    $region35: #{tpu_custom_call.1} parent=1 // pred_check_branch
      %1828 = sbr.rel (0) target = $region37
    $region36: #{tpu_custom_call.1} parent=1 // pred_region
      %1829 = dma.done [#allocation3], 128
    $region37: #{tpu_custom_call.1} parent=1 // pred_fallthru
      _
    %1830 = vsyncpa [#allocation3], 1

</llo_original>
